<compile_context>
chip_gen: v7x
topology: tpu7x:2x2x1
jax: 0.10.0
libtpu: 0.0.40
codegen_flags: <defaults>
</compile_context>

<pallas_src>
import functools

import jax
import jax.numpy as jnp
from jax.experimental import pallas as pl
from jax.experimental.pallas import tpu as pltpu

_MiB = 1024 * 1024


def _partial_nll_body(lp_ref, lm_ref, lpd_ref, lmd_ref, out_ref, *, n_rows, win_stride):
    """Per-tile sum of (logsumexp(row) - x[row, row]) for both logit matrices.

    lpd_ref / lmd_ref are the "diagonal window" refs: either a (tm, tm) block that
    contains this tile's diagonal (windowed variant, win_stride == tm) or the full
    (tm, M) block itself (full-width variant, win_stride == 0).
    """
    tm, _ = lp_ref.shape
    w = lpd_ref.shape[-1]
    i = pl.program_id(0)
    row0 = i * tm                      # first global row of this tile
    win0 = i * win_stride              # first global column of the diag window

    local_row = jax.lax.broadcasted_iota(jnp.int32, (tm, 1), 0)
    grow = local_row + row0                               # global row ids
    row_valid = grow < n_rows                             # masks ragged tail rows
    diag_col = grow - win0                                 # diag column inside window
    win_col = jax.lax.broadcasted_iota(jnp.int32, (tm, w), 1)
    diag_mask = win_col == diag_col                        # (tm, w)

    def one(x_ref, xd_ref):
        x_nat = x_ref[...]
        # max / single-nonzero select are exact in the native dtype (bf16 ok);
        # only the exp/log path needs the f32 cast (PyTorch `.float()` semantics).
        row_max = jnp.max(x_nat, axis=-1, keepdims=True).astype(jnp.float32)
        x = x_nat.astype(jnp.float32)
        lse = jnp.log(jnp.sum(jnp.exp(x - row_max), axis=-1, keepdims=True)) + row_max
        xd = xd_ref[...]
        diag = jnp.sum(jnp.where(diag_mask, xd, jnp.zeros_like(xd)),
                       axis=-1, keepdims=True).astype(jnp.float32)
        return jnp.sum(jnp.where(row_valid, lse - diag, 0.0))

    lp_part = one(lp_ref, lpd_ref)
    lm_part = one(lm_ref, lmd_ref)

    # Lane-dense (1, 8, 128) partial block: element 0 = pocket sum, element 1 = mol sum.
    sub = jax.lax.broadcasted_iota(jnp.int32, (1, 8, 128), 1)
    lane = jax.lax.broadcasted_iota(jnp.int32, (1, 8, 128), 2)
    slot = sub * 128 + lane
    out_ref[...] = jnp.where(slot == 0, lp_part, jnp.where(slot == 1, lm_part, 0.0))


def _kernel_windowed(lp_ref, lm_ref, lpd_ref, lmd_ref, out_ref, *, n_rows, tm):
    _partial_nll_body(lp_ref, lm_ref, lpd_ref, lmd_ref, out_ref,
                      n_rows=n_rows, win_stride=tm)


def _kernel_fullwidth(lp_ref, lm_ref, out_ref, *, n_rows):
    # Diag window == the full-width block itself (no extra DMA stream).
    _partial_nll_body(lp_ref, lm_ref, lp_ref, lm_ref, out_ref,
                      n_rows=n_rows, win_stride=0)


def _vmem_capacity_bytes():
    """Per-core VMEM capacity; conservative v7x-class default if the query fails."""
    try:
        cap = int(getattr(pltpu.get_tpu_info(), "vmem_capacity_bytes", 0))
        if cap > 0:
            return cap
    except Exception:
        pass
    return 64 * _MiB


def _choose_row_tile(n, m, vmem_cap_bytes):
    """Row-tile height sized from the f32 working set, generation aware."""
    small_vmem = vmem_cap_bytes <= 64 * _MiB          # v7x-class parts
    f32_budget = (4 if small_vmem else 8) * _MiB       # per input block, f32 bytes
    row_cap = 512 if small_vmem else 1024              # bounds the (tm, tm) diag block
    rows = max(8, f32_budget // (m * 4))
    if rows >= n:
        return int(n)                                  # whole problem fits the budget
    if rows >= 128:
        return int(min(row_cap, (rows // 128) * 128))  # 128-aligned -> diag-window path
    # Very wide M: thin full-width tiles (masking still correct, just not windowed).
    # TODO(synk): column-tiled online-LSE accumulation for pathological M (>~1e5 classes).
    return int(max(8, (rows // 8) * 8))


def in_batch_softmax(logits_per_pocket, logits_per_mol, reduction="mean", row_tile=None):
    assert logits_per_pocket.ndim == 2 and logits_per_pocket.shape == logits_per_mol.shape
    n, m = logits_per_pocket.shape
    assert m >= n, "target arange(N) must be a valid class index (requires M >= N)"
    assert reduction in ("mean", "sum")  # TODO(synk): reduction='none' (per-row) not wired up

    itemsize = max(logits_per_pocket.dtype.itemsize, logits_per_mol.dtype.itemsize)
    vmem_cap = _vmem_capacity_bytes()

    if row_tile is not None:
        tm = int(min(row_tile, n))
        if tm != n and tm % 8 != 0:
            tm = max(8, (tm // 8) * 8)
    else:
        tm = _choose_row_tile(n, m, vmem_cap)
    num_tiles = int(pl.cdiv(n, tm))
    # Diagonal-window variant needs lane-aligned (multiple-of-128) square blocks.
    windowed = num_tiles > 1 and tm % 128 == 0

    full_spec = pl.BlockSpec((tm, m), lambda i: (i, 0))
    out_spec = pl.BlockSpec((1, 8, 128), lambda i: (i, 0, 0))
    if windowed:
        diag_spec = pl.BlockSpec((tm, tm), lambda i: (i, i))
        kernel = functools.partial(_kernel_windowed, n_rows=n, tm=tm)
        in_specs = [full_spec, full_spec, diag_spec, diag_spec]
        operands = (logits_per_pocket, logits_per_mol,
                    logits_per_pocket, logits_per_mol)
        diag_native = tm * tm * itemsize
        diag_f32 = tm * tm * 4
    else:
        kernel = functools.partial(_kernel_fullwidth, n_rows=n)
        in_specs = [full_spec, full_spec]
        operands = (logits_per_pocket, logits_per_mol)
        diag_native = 0
        diag_f32 = 0

    # Scoped-VMEM limit from the real working set (native blocks double-buffered,
    # f32 casts + exp intermediates, diag blocks), capped below physical capacity.
    # NOTE: if profiling on v5e still shows exposed DMA, bump pipeline_mode=pl.Buffered(3)
    # on the two full-width in_specs.
    native_block = tm * m * itemsize
    f32_block = tm * m * 4
    need = (4 * native_block + 4 * diag_native      # 2 inputs (+2 diag) x 2 buffers
            + 4 * f32_block + 2 * diag_f32          # f32 casts / exp intermediates
            + 2 * _MiB)                              # masks, iotas, output, slack
    hard_cap = max(16 * _MiB, min(vmem_cap - 8 * _MiB, 100 * _MiB))
    vmem_limit = int(min(hard_cap, max(16 * _MiB, need)))

    cost = pl.CostEstimate(
        flops=int(8 * n * m),
        transcendentals=int(2 * n * m),
        bytes_accessed=int(2 * n * m * itemsize + 2 * num_tiles * diag_native
                           + num_tiles * 8 * 128 * 4),
    )

    partials = pl.pallas_call(
        kernel,
        out_shape=jax.ShapeDtypeStruct((num_tiles, 8, 128), jnp.float32),
        grid=(num_tiles,),
        in_specs=in_specs,
        out_specs=out_spec,
        compiler_params=pltpu.CompilerParams(
            dimension_semantics=("parallel",),
            vmem_limit_bytes=vmem_limit,
        ),
        cost_estimate=cost,
    )(*operands)

    lp_sum = jnp.sum(partials[:, 0, 0])
    lm_sum = jnp.sum(partials[:, 0, 1])
    denom = jnp.float32(n) if reduction == "mean" else jnp.float32(1.0)
    loss_pocket = lp_sum / denom
    loss_mol = lm_sum / denom
    loss = 0.5 * loss_pocket + 0.5 * loss_mol
    target = jnp.arange(n, dtype=jnp.int32)  # PyTorch uses int64; int32 under default JAX config
    return {"loss": loss, "loss_pocket": loss_pocket, "loss_mol": loss_mol,
            "target": target}


def _reference(lp, lm):
    n = lp.shape[0]
    idx = jnp.arange(n)
    plog = jax.nn.log_softmax(lp.astype(jnp.float32), axis=-1)
    mlog = jax.nn.log_softmax(lm.astype(jnp.float32), axis=-1)
    loss_p = -jnp.mean(plog[idx, idx])
    loss_m = -jnp.mean(mlog[idx, idx])
    return 0.5 * loss_p + 0.5 * loss_m, loss_p, loss_m


def _check(res, lp, lm, atol, rtol):
    ref_loss, ref_lp, ref_lm = _reference(lp, lm)
    assert jnp.allclose(res["loss"], ref_loss, atol=atol, rtol=rtol), (res["loss"], ref_loss)
    assert jnp.allclose(res["loss_pocket"], ref_lp, atol=atol, rtol=rtol)
    assert jnp.allclose(res["loss_mol"], ref_lm, atol=atol, rtol=rtol)
    assert jnp.array_equal(res["target"], jnp.arange(lp.shape[0], dtype=jnp.int32))


if __name__ == "__main__":
    key = jax.random.PRNGKey(0)
    keys = jax.random.split(key, 6)

    # 1) Windowed multi-tile path (tm=128, 2 tiles) with a ragged row tail (N=200).
    n1, m1 = 200, 320
    lp1 = jax.random.normal(keys[0], (n1, m1), dtype=jnp.float32) * 3.0
    lm1 = jax.random.normal(keys[1], (n1, m1), dtype=jnp.float32) * 3.0
    res1 = in_batch_softmax(lp1, lm1, row_tile=128)
    jax.block_until_ready(res1["loss"])
    _check(res1, lp1, lm1, atol=1e-5, rtol=1e-5)

    # 2) Tiny bf16 single-tile case (auto tile -> full height, full-width diag path).
    n2 = 8
    lp2 = (jax.random.normal(keys[2], (n2, n2), dtype=jnp.float32) * 3.0).astype(jnp.bfloat16)
    lm2 = (jax.random.normal(keys[3], (n2, n2), dtype=jnp.float32) * 3.0).astype(jnp.bfloat16)
    res2 = in_batch_softmax(lp2, lm2)
    jax.block_until_ready(res2["loss"])
    _check(res2, lp2, lm2, atol=1e-4, rtol=1e-4)

    # 3) Full-width multi-tile path with a small unaligned tile and ragged tail.
    n3, m3 = 100, 160
    lp3 = jax.random.normal(keys[4], (n3, m3), dtype=jnp.float32) * 3.0
    lm3 = jax.random.normal(keys[5], (n3, m3), dtype=jnp.float32) * 3.0
    res3 = in_batch_softmax(lp3, lm3, row_tile=32, reduction="mean")
    jax.block_until_ready(res3["loss"])
    _check(res3, lp3, lm3, atol=1e-5, rtol=1e-5)

    print("KERNEL_OK")
</pallas_src>

<mosaic_0001>
module attributes {stable_mosaic.version = 11 : i64} {
  func.func @_kernel_windowed(%arg0: i32, %arg1: memref<128x320xf32, #tpu.memory_space<vmem>>, %arg2: memref<128x320xf32, #tpu.memory_space<vmem>>, %arg3: memref<128x128xf32, #tpu.memory_space<vmem>>, %arg4: memref<128x128xf32, #tpu.memory_space<vmem>>, %arg5: memref<1x8x128xf32, #tpu.memory_space<vmem>>) attributes {dimension_semantics = [#tpu.dimension_semantics<parallel>], iteration_bounds = array<i64: 2>, scalar_prefetch = 0 : i64, scratch_operands = 0 : i64, tpu.core_type = #tpu.core_type<tc>, window_params = [{transform_indices = @transform_0, window_bounds = array<i64: 128, 320>}, {transform_indices = @transform_1, window_bounds = array<i64: 128, 320>}, {transform_indices = @transform_2, window_bounds = array<i64: 128, 128>}, {transform_indices = @transform_3, window_bounds = array<i64: 128, 128>}, {transform_indices = @transform_4, window_bounds = array<i64: 1, 8, 128>}]} {
    %c128_i32 = arith.constant 128 : i32
    %0 = arith.muli %arg0, %c128_i32 : i32
    %c128_i32_0 = arith.constant 128 : i32
    %1 = arith.muli %arg0, %c128_i32_0 : i32
    %2 = tpu.iota {dimensions = array<i32: 0>} : vector<128x1xi32>
    %3 = vector.broadcast %0 : i32 to vector<128x1xi32>
    %4 = arith.addi %2, %3 : vector<128x1xi32>
    %c200_i32 = arith.constant 200 : i32
    %5 = vector.broadcast %c200_i32 : i32 to vector<128x1xi32>
    %6 = arith.cmpi slt, %4, %5 : vector<128x1xi32>
    %7 = vector.broadcast %1 : i32 to vector<128x1xi32>
    %8 = arith.subi %4, %7 : vector<128x1xi32>
    %9 = tpu.iota {dimensions = array<i32: 1>} : vector<128x128xi32>
    %10 = vector.broadcast %8 : vector<128x1xi32> to vector<128x128xi32>
    %11 = arith.cmpi eq, %9, %10 : vector<128x128xi32>
    %c0 = arith.constant 0 : index
    %c0_1 = arith.constant 0 : index
    %12 = vector.load %arg1[%c0, %c0_1] : memref<128x320xf32, #tpu.memory_space<vmem>>, vector<128x320xf32>
    %cst = arith.constant dense<0xFF800000> : vector<128xf32>
    %13 = vector.multi_reduction <maximumf>, %12, %cst [1] : vector<128x320xf32> to vector<128xf32>
    %14 = vector.shape_cast %13 : vector<128xf32> to vector<128x1xf32>
    %15 = vector.broadcast %14 : vector<128x1xf32> to vector<128x320xf32>
    %16 = arith.subf %12, %15 : vector<128x320xf32>
    %17 = math.exp %16 : vector<128x320xf32>
    %cst_2 = arith.constant dense<0.000000e+00> : vector<128xf32>
    %18 = vector.multi_reduction <add>, %17, %cst_2 [1] : vector<128x320xf32> to vector<128xf32>
    %19 = vector.shape_cast %18 : vector<128xf32> to vector<128x1xf32>
    %20 = math.log %19 : vector<128x1xf32>
    %21 = arith.addf %20, %14 : vector<128x1xf32>
    %c0_3 = arith.constant 0 : index
    %c0_4 = arith.constant 0 : index
    %22 = vector.load %arg3[%c0_3, %c0_4] : memref<128x128xf32, #tpu.memory_space<vmem>>, vector<128x128xf32>
    %cst_5 = arith.constant 0.000000e+00 : f32
    %23 = vector.broadcast %cst_5 : f32 to vector<128x128xf32>
    %24 = arith.select %11, %22, %23 : vector<128x128xi1>, vector<128x128xf32>
    %cst_6 = arith.constant dense<0.000000e+00> : vector<128xf32>
    %25 = vector.multi_reduction <add>, %24, %cst_6 [1] : vector<128x128xf32> to vector<128xf32>
    %26 = vector.shape_cast %25 : vector<128xf32> to vector<128x1xf32>
    %27 = arith.subf %21, %26 : vector<128x1xf32>
    %cst_7 = arith.constant 0.000000e+00 : f32
    %28 = vector.broadcast %cst_7 : f32 to vector<128x1xf32>
    %29 = arith.select %6, %27, %28 : vector<128x1xi1>, vector<128x1xf32>
    %30 = vector.shape_cast %29 : vector<128x1xf32> to vector<1x128x1xf32>
    %cst_8 = arith.constant dense<0.000000e+00> : vector<1xf32>
    %31 = vector.multi_reduction <add>, %30, %cst_8 [1, 2] : vector<1x128x1xf32> to vector<1xf32>
    %32 = vector.shape_cast %31 : vector<1xf32> to vector<1x1x1xf32>
    %33 = vector.extract %32[0, 0, 0] : f32 from vector<1x1x1xf32>
    %c0_9 = arith.constant 0 : index
    %c0_10 = arith.constant 0 : index
    %34 = vector.load %arg2[%c0_9, %c0_10] : memref<128x320xf32, #tpu.memory_space<vmem>>, vector<128x320xf32>
    %cst_11 = arith.constant dense<0xFF800000> : vector<128xf32>
    %35 = vector.multi_reduction <maximumf>, %34, %cst_11 [1] : vector<128x320xf32> to vector<128xf32>
    %36 = vector.shape_cast %35 : vector<128xf32> to vector<128x1xf32>
    %37 = vector.broadcast %36 : vector<128x1xf32> to vector<128x320xf32>
    %38 = arith.subf %34, %37 : vector<128x320xf32>
    %39 = math.exp %38 : vector<128x320xf32>
    %cst_12 = arith.constant dense<0.000000e+00> : vector<128xf32>
    %40 = vector.multi_reduction <add>, %39, %cst_12 [1] : vector<128x320xf32> to vector<128xf32>
    %41 = vector.shape_cast %40 : vector<128xf32> to vector<128x1xf32>
    %42 = math.log %41 : vector<128x1xf32>
    %43 = arith.addf %42, %36 : vector<128x1xf32>
    %c0_13 = arith.constant 0 : index
    %c0_14 = arith.constant 0 : index
    %44 = vector.load %arg4[%c0_13, %c0_14] : memref<128x128xf32, #tpu.memory_space<vmem>>, vector<128x128xf32>
    %cst_15 = arith.constant 0.000000e+00 : f32
    %45 = vector.broadcast %cst_15 : f32 to vector<128x128xf32>
    %46 = arith.select %11, %44, %45 : vector<128x128xi1>, vector<128x128xf32>
    %cst_16 = arith.constant dense<0.000000e+00> : vector<128xf32>
    %47 = vector.multi_reduction <add>, %46, %cst_16 [1] : vector<128x128xf32> to vector<128xf32>
    %48 = vector.shape_cast %47 : vector<128xf32> to vector<128x1xf32>
    %49 = arith.subf %43, %48 : vector<128x1xf32>
    %cst_17 = arith.constant 0.000000e+00 : f32
    %50 = vector.broadcast %cst_17 : f32 to vector<128x1xf32>
    %51 = arith.select %6, %49, %50 : vector<128x1xi1>, vector<128x1xf32>
    %52 = vector.shape_cast %51 : vector<128x1xf32> to vector<1x128x1xf32>
    %cst_18 = arith.constant dense<0.000000e+00> : vector<1xf32>
    %53 = vector.multi_reduction <add>, %52, %cst_18 [1, 2] : vector<1x128x1xf32> to vector<1xf32>
    %54 = vector.shape_cast %53 : vector<1xf32> to vector<1x1x1xf32>
    %55 = vector.extract %54[0, 0, 0] : f32 from vector<1x1x1xf32>
    %56 = tpu.iota {dimensions = array<i32: 1>} : vector<1x8x128xi32>
    %57 = tpu.iota {dimensions = array<i32: 2>} : vector<1x8x128xi32>
    %c128_i32_19 = arith.constant 128 : i32
    %58 = vector.broadcast %c128_i32_19 : i32 to vector<1x8x128xi32>
    %59 = arith.muli %56, %58 : vector<1x8x128xi32>
    %60 = arith.addi %59, %57 : vector<1x8x128xi32>
    %c0_i32 = arith.constant 0 : i32
    %61 = vector.broadcast %c0_i32 : i32 to vector<1x8x128xi32>
    %62 = arith.cmpi eq, %60, %61 : vector<1x8x128xi32>
    %c1_i32 = arith.constant 1 : i32
    %63 = vector.broadcast %c1_i32 : i32 to vector<1x8x128xi32>
    %64 = arith.cmpi eq, %60, %63 : vector<1x8x128xi32>
    %cst_20 = arith.constant 0.000000e+00 : f32
    %65 = vector.broadcast %55 : f32 to vector<1x8x128xf32>
    %66 = vector.broadcast %cst_20 : f32 to vector<1x8x128xf32>
    %67 = arith.select %64, %65, %66 : vector<1x8x128xi1>, vector<1x8x128xf32>
    %68 = vector.broadcast %33 : f32 to vector<1x8x128xf32>
    %69 = arith.select %62, %68, %67 : vector<1x8x128xi1>, vector<1x8x128xf32>
    %c0_21 = arith.constant 0 : index
    %c0_22 = arith.constant 0 : index
    %c0_23 = arith.constant 0 : index
    %70 = vector.load %arg5[%c0_21, %c0_22, %c0_23] : memref<1x8x128xf32, #tpu.memory_space<vmem>>, vector<1x8x128xf32>
    tpu.vector_store %arg5[%c0_21, %c0_22, %c0_23], %69 {strides = array<i32>} : memref<1x8x128xf32, #tpu.memory_space<vmem>>, vector<1x8x128xf32>,
    return
  }
  func.func @transform_0(%arg0: i32) -> (i32, i32) {
    %c0_i32 = arith.constant 0 : i32
    %c0_i32_0 = arith.constant 0 : i32
    return %arg0, %c0_i32 : i32, i32
  }
  func.func @transform_1(%arg0: i32) -> (i32, i32) {
    %c0_i32 = arith.constant 0 : i32
    %c0_i32_0 = arith.constant 0 : i32
    return %arg0, %c0_i32 : i32, i32
  }
  func.func @transform_2(%arg0: i32) -> (i32, i32) {
    %c0_i32 = arith.constant 0 : i32
    return %arg0, %arg0 : i32, i32
  }
  func.func @transform_3(%arg0: i32) -> (i32, i32) {
    %c0_i32 = arith.constant 0 : i32
    return %arg0, %arg0 : i32, i32
  }
  func.func @transform_4(%arg0: i32) -> (i32, i32, i32) {
    %c0_i32 = arith.constant 0 : i32
    %c0_i32_0 = arith.constant 0 : i32
    %c0_i32_1 = arith.constant 0 : i32
    return %arg0, %c0_i32, %c0_i32_0 : i32, i32, i32
  }
}

</mosaic_0001>

<llo_original>
// kernel: tpu_custom_call.1
$region0: #{tpu_custom_call.1}
  #allocation0 [shape = 'u32[]', space=smem, size = 0x4, offset = 0x4, fixed_abs, tag = 'smem constant byte address 0x4 - core index']
  #allocation1 [shape = 'u32[144,128]{1,0:T(1,128)}', space=vmem, size = 0x12000, scoped, tag = 'internal scratch']
  %s0 = inlined_call_operand.hbm [shape: f32[200,320], index: 0, kind: input, shape index: {}]
  %s1 = inlined_call_operand.hbm [shape: f32[200,320], index: 1, kind: input, shape index: {}]
  %s2 = inlined_call_operand.hbm [shape: f32[200,320], index: 2, kind: input, shape index: {}]
  %s3 = inlined_call_operand.hbm [shape: f32[200,320], index: 3, kind: input, shape index: {}]
  %s4 = inlined_call_operand.hbm [shape: f32[2,8,128], index: 4, kind: output, shape index: {}]
  %s5 = sld [smem:[#allocation0]]
  $region65: #{tpu_custom_call.1} parent=0
    _
  %s7 = ssub.s32 1, %s5
  %s8 = scalar_select 0, %s7, %s5
  $region1: #{tpu_custom_call.1} parent=0
    #allocation2 [shape = 'u8[393216]{0}', space=vmem, size = 0x60000, scoped, tag = 'input window, operand 0']
    #allocation3 [shape = 's32[2]{0}', space=sflag, size = 0x8, scoped, tag = 'scoped memory for tpu_custom_call.1']
    #allocation4 [shape = 's32[2]{0}', space=sflag, size = 0x8, scoped, tag = 'scoped memory for tpu_custom_call.1']
    #allocation5 [shape = 'u8[393216]{0}', space=vmem, size = 0x60000, scoped, tag = 'input window, operand 1']
    #allocation6 [shape = 's32[2]{0}', space=sflag, size = 0x8, scoped, tag = 'scoped memory for tpu_custom_call.1']
    #allocation7 [shape = 'u8[131072]{0}', space=vmem, size = 0x20000, scoped, tag = 'input window, operand 2']
    #allocation8 [shape = 'u8[131072]{0}', space=vmem, size = 0x20000, scoped, tag = 'input window, operand 3']
    #allocation9 [shape = 's32[2]{0}', space=sflag, size = 0x8, scoped, tag = 'scoped memory for tpu_custom_call.1']
    #allocation10 [shape = 'u8[8192]{0}', space=vmem, size = 0x2000, scoped, tag = 'output window, operand 0']
    %9 = vsyncpa [#allocation3], 0
    %s10 = scalar_lea.sflag [#allocation3], 1
    %11 = vsyncpa %s10, 0
    %12 = vsyncpa [#allocation6], 0
    %s13 = scalar_lea.sflag [#allocation6], 1
    %14 = vsyncpa %s13, 0
    %15 = vsyncpa [#allocation9], 0
    %s16 = scalar_lea.sflag [#allocation9], 1
    %17 = vsyncpa %s16, 0
    %18 = vsyncpa [#allocation4], 0
    %s19 = scalar_lea.sflag [#allocation4], 1
    %20 = vsyncpa %s19, 0
    loop: start=0, step=1, limit=4
    $region2: #{tpu_custom_call.1} parent=1 // loop_pre_header
      _
    $region3: #{tpu_custom_call.1} parent=1 // loop_header
      %s22 = sphi 0, %s26
      %p23 = scmp.ge.s32.totalorder %s22, 4
      %s32 = sphi 0, %s34
      %s35 = sphi 0, %s32
      %s36 = sphi 0, %s35
      %s52 = sphi 0, %s36
      %s58 = sphi 0, %s60
      %s61 = sphi 0, %s58
      %s62 = sphi 0, %s61
      %s78 = sphi 0, %s62
      %s86 = sphi 0, %s88
      %s89 = sphi 0, %s86
      %s90 = sphi 0, %s89
      %s106 = sphi 0, %s90
      %s114 = sphi 0, %s116
      %s117 = sphi 0, %s114
      %s118 = sphi 0, %s117
      %s134 = sphi 0, %s118
      %s140 = sphi 0, %s142
      %s143 = sphi 0, %s140
      %s144 = sphi 0, %s143
      %s160 = sphi 0, %s144
    $region4: #{tpu_custom_call.1} parent=1 // loop_header_branch
      %25 = sbr.rel (%p23) target = $region8
    $region5: #{tpu_custom_call.1} parent=1 // loop_body
      %s27 = ssub.s32 %s22, 1
      %s28 = ssub.s32 %s22, 2
      %s29 = sadd.s32 %s22, 1
      %s30 = ssub.s32 %s22, %s29
      %p31 = scmp.eq.s32.totalorder %s30, 0
      %s33 = sadd.s32 %s32, 1
      %s34 = scalar_select %p31, %s32, %s33
      %p37 = pneg %p31
      %p38 = scmp.eq.s32.totalorder %s22, 1
      %p39 = por %p37, %p38
      %p40 = scmp.ne.s32.totalorder %s32, %s35
      %p41 = scmp.eq.s32.totalorder %s22, 0
      %p42 = por %p40, %p41
      %p43 = scmp.ne.s32.totalorder %s32, %s35
      %p44 = scmp.eq.s32.totalorder %s27, 1
      %p45 = por %p43, %p44
      %p46 = scmp.ne.s32.totalorder %s35, %s36
      %p47 = scmp.eq.s32.totalorder %s27, 0
      %p48 = por %p46, %p47
      %p49 = scmp.ne.s32.totalorder %s35, %s36
      %p50 = scmp.eq.s32.totalorder %s28, 1
      %p51 = por %p49, %p50
      %p53 = scmp.ne.s32.totalorder %s36, %s52
      %p54 = scmp.eq.s32.totalorder %s28, 0
      %p55 = por %p53, %p54
      %s56 = ssub.s32 %s22, %s29
      %p57 = scmp.eq.s32.totalorder %s56, 0
      %s59 = sadd.s32 %s58, 1
      %s60 = scalar_select %p57, %s58, %s59
      %p63 = pneg %p57
      %p64 = scmp.eq.s32.totalorder %s22, 1
      %p65 = por %p63, %p64
      %p66 = scmp.ne.s32.totalorder %s58, %s61
      %p67 = scmp.eq.s32.totalorder %s22, 0
      %p68 = por %p66, %p67
      %p69 = scmp.ne.s32.totalorder %s58, %s61
      %p70 = scmp.eq.s32.totalorder %s27, 1
      %p71 = por %p69, %p70
      %p72 = scmp.ne.s32.totalorder %s61, %s62
      %p73 = scmp.eq.s32.totalorder %s27, 0
      %p74 = por %p72, %p73
      %p75 = scmp.ne.s32.totalorder %s61, %s62
      %p76 = scmp.eq.s32.totalorder %s28, 1
      %p77 = por %p75, %p76
      %p79 = scmp.ne.s32.totalorder %s62, %s78
      %p80 = scmp.eq.s32.totalorder %s28, 0
      %p81 = por %p79, %p80
      %s82 = ssub.s32 %s22, %s29
      %s83 = ssub.s32 %s22, %s29
      %s84 = sor.u32 %s82, %s83
      %p85 = scmp.eq.s32.totalorder %s84, 0
      %s87 = sadd.s32 %s86, 1
      %s88 = scalar_select %p85, %s86, %s87
      %p91 = pneg %p85
      %p92 = scmp.eq.s32.totalorder %s22, 1
      %p93 = por %p91, %p92
      %p94 = scmp.ne.s32.totalorder %s86, %s89
      %p95 = scmp.eq.s32.totalorder %s22, 0
      %p96 = por %p94, %p95
      %p97 = scmp.ne.s32.totalorder %s86, %s89
      %p98 = scmp.eq.s32.totalorder %s27, 1
      %p99 = por %p97, %p98
      %p100 = scmp.ne.s32.totalorder %s89, %s90
      %p101 = scmp.eq.s32.totalorder %s27, 0
      %p102 = por %p100, %p101
      %p103 = scmp.ne.s32.totalorder %s89, %s90
      %p104 = scmp.eq.s32.totalorder %s28, 1
      %p105 = por %p103, %p104
      %p107 = scmp.ne.s32.totalorder %s90, %s106
      %p108 = scmp.eq.s32.totalorder %s28, 0
      %p109 = por %p107, %p108
      %s110 = ssub.s32 %s22, %s29
      %s111 = ssub.s32 %s22, %s29
      %s112 = sor.u32 %s110, %s111
      %p113 = scmp.eq.s32.totalorder %s112, 0
      %s115 = sadd.s32 %s114, 1
      %s116 = scalar_select %p113, %s114, %s115
      %p119 = pneg %p113
      %p120 = scmp.eq.s32.totalorder %s22, 1
      %p121 = por %p119, %p120
      %p122 = scmp.ne.s32.totalorder %s114, %s117
      %p123 = scmp.eq.s32.totalorder %s22, 0
      %p124 = por %p122, %p123
      %p125 = scmp.ne.s32.totalorder %s114, %s117
      %p126 = scmp.eq.s32.totalorder %s27, 1
      %p127 = por %p125, %p126
      %p128 = scmp.ne.s32.totalorder %s117, %s118
      %p129 = scmp.eq.s32.totalorder %s27, 0
      %p130 = por %p128, %p129
      %p131 = scmp.ne.s32.totalorder %s117, %s118
      %p132 = scmp.eq.s32.totalorder %s28, 1
      %p133 = por %p131, %p132
      %p135 = scmp.ne.s32.totalorder %s118, %s134
      %p136 = scmp.eq.s32.totalorder %s28, 0
      %p137 = por %p135, %p136
      %s138 = ssub.s32 %s22, %s29
      %p139 = scmp.eq.s32.totalorder %s138, 0
      %s141 = sadd.s32 %s140, 1
      %s142 = scalar_select %p139, %s140, %s141
      %p145 = pneg %p139
      %p146 = scmp.eq.s32.totalorder %s22, 1
      %p147 = por %p145, %p146
      %p148 = scmp.ne.s32.totalorder %s140, %s143
      %p149 = scmp.eq.s32.totalorder %s22, 0
      %p150 = por %p148, %p149
      %p151 = scmp.ne.s32.totalorder %s140, %s143
      %p152 = scmp.eq.s32.totalorder %s27, 1
      %p153 = por %p151, %p152
      %p154 = scmp.ne.s32.totalorder %s143, %s144
      %p155 = scmp.eq.s32.totalorder %s27, 0
      %p156 = por %p154, %p155
      %p157 = scmp.ne.s32.totalorder %s143, %s144
      %p158 = scmp.eq.s32.totalorder %s28, 1
      %p159 = por %p157, %p158
      %p161 = scmp.ne.s32.totalorder %s144, %s160
      %p162 = scmp.eq.s32.totalorder %s28, 0
      %p163 = por %p161, %p162
      %p164 = scmp.le.s32.totalorder 1, %s22
      %p165 = scmp.lt.s32.totalorder %s22, 3
      %p166 = pnand %p164, %p165
      %p167 = pneg %p166
      // Predicated region
      $region9: #{tpu_custom_call.1} parent=5 // pred_check
        _
      $region10: #{tpu_custom_call.1} parent=5 // pred_check_branch
        %169 = sbr.rel (%p166) target = $region12
      $region11: #{tpu_custom_call.1} parent=5 // pred_region
        %s170 = ssub.s32 %s22, 1
      $region12: #{tpu_custom_call.1} parent=5 // pred_fallthru
        _
      %p171 = scmp.lt.s32.totalorder %s22, 2
      // Predicated region
      $region13: #{tpu_custom_call.1} parent=5 // pred_check
        %p172 = pneg %p171
      $region14: #{tpu_custom_call.1} parent=5 // pred_check_branch
        %174 = sbr.rel (%p172) target = $region16
      $region15: #{tpu_custom_call.1} parent=5 // pred_region
        // Predicated region
        $region17: #{tpu_custom_call.1} parent=15 // pred_check
          %p175 = pneg %p42
        $region18: #{tpu_custom_call.1} parent=15 // pred_check_branch
          %177 = sbr.rel (%p175) target = $region20
        $region19: #{tpu_custom_call.1} parent=15 // pred_region
          %s178 = sand.u32 %s32, 1
          %s179 = scalar_lea.sflag [#allocation3], %s178
          %s180 = sand.u32 %s32, 1
          %s181 = smul.addr %s180, 384
          %s182 = scalar_lea.vmem [#allocation2], %s181
          %s183 = smul.u32 16, %s22
          %s184 = ssub.s32 25, %s183
          %p185 = scmp.lt.s32.totalorder %s184, 16
          %s186 = scalar_select %p185, %s184, 16
          %s187 = smul.u32 128, %s186
          %s188 = smul.u32 %s187, 3
          %s190 = ssub.s32 6144, %s188
          %191 = vsyncadd %s179, %s190
          %p192 = scmp.ne.s32.totalorder 0, %s188
          %s193 = smul.addr %s183, 3
          %s194 = smul.addr %s193, 128
          %s195 = scalar_lea.hbm %s0, %s194
          %s196 = smul.u32 24, %s186
          %s197 = sshll.u32 %s182, 4
          %s198 = int_to_ptr.vmem [resolvable:$true] %s197
          %s199 = sshll.u32 %s196, 4
          %203 = dma.hbm_to_vmem [thread:$0]  (%p192), %s195, %s199, %s198, %s179, 384, 384, 24
        $region20: #{tpu_custom_call.1} parent=15 // pred_fallthru
          _
        // Predicated region
        $region21: #{tpu_custom_call.1} parent=15 // pred_check
          %p204 = pneg %p68
        $region22: #{tpu_custom_call.1} parent=15 // pred_check_branch
          %206 = sbr.rel (%p204) target = $region24
        $region23: #{tpu_custom_call.1} parent=15 // pred_region
          %s207 = sand.u32 %s22, 1
          %s208 = scalar_lea.sflag [#allocation6], %s207
          %s209 = sand.u32 %s58, 1
          %s210 = smul.addr %s209, 384
          %s211 = scalar_lea.vmem [#allocation5], %s210
          %s212 = smul.u32 16, %s22
          %s213 = ssub.s32 25, %s212
          %p214 = scmp.lt.s32.totalorder %s213, 16
          %s215 = scalar_select %p214, %s213, 16
          %s216 = smul.u32 128, %s215
          %s217 = smul.u32 %s216, 3
          %s219 = ssub.s32 6144, %s217
          %220 = vsyncadd %s208, %s219
          %p221 = scmp.ne.s32.totalorder 0, %s217
          %s222 = smul.addr %s212, 3
          %s223 = smul.addr %s222, 128
          %s224 = scalar_lea.hbm %s1, %s223
          %s225 = smul.u32 24, %s215
          %s226 = sshll.u32 %s211, 4
          %s227 = int_to_ptr.vmem [resolvable:$true] %s226
          %s228 = sshll.u32 %s225, 4
          %232 = dma.hbm_to_vmem [thread:$0]  (%p221), %s224, %s228, %s227, %s208, 384, 384, 24
        $region24: #{tpu_custom_call.1} parent=15 // pred_fallthru
          _
        // Predicated region
        $region25: #{tpu_custom_call.1} parent=15 // pred_check
          %p233 = pneg %p96
        $region26: #{tpu_custom_call.1} parent=15 // pred_check_branch
          %235 = sbr.rel (%p233) target = $region28
        $region27: #{tpu_custom_call.1} parent=15 // pred_region
          %s236 = sand.u32 %s22, 1
          %s237 = scalar_lea.sflag [#allocation6], %s236
          %s238 = sand.u32 %s86, 1
          %s239 = smul.addr %s238, 128
          %s240 = scalar_lea.vmem [#allocation7], %s239
          %s241 = smul.u32 16, %s22
          %s242 = ssub.s32 25, %s241
          %p243 = scmp.lt.s32.totalorder %s242, 16
          %s244 = scalar_select %p243, %s242, 16
          %s245 = smul.u32 128, %s244
          %s247 = ssub.s32 2048, %s245
          %248 = vsyncadd %s237, %s247
          %p249 = scmp.ne.s32.totalorder 0, %s245
          %s250 = smul.addr %s241, 3
          %s251 = sadd.s32 %s22, %s250
          %s252 = smul.addr %s251, 128
          %s253 = scalar_lea.hbm %s2, %s252
          %s254 = smul.u32 8, %s244
          %s255 = sshll.u32 %s240, 4
          %s256 = int_to_ptr.vmem [resolvable:$true] %s255
          %s257 = sshll.u32 %s254, 4
          %261 = dma.hbm_to_vmem [thread:$0]  (%p249), %s253, %s257, %s256, %s237, 384, 128, 8
        $region28: #{tpu_custom_call.1} parent=15 // pred_fallthru
          _
        // Predicated region
        $region29: #{tpu_custom_call.1} parent=15 // pred_check
          %p262 = pneg %p124
        $region30: #{tpu_custom_call.1} parent=15 // pred_check_branch
          %264 = sbr.rel (%p262) target = $region32
        $region31: #{tpu_custom_call.1} parent=15 // pred_region
          %s265 = sand.u32 %s114, 1
          %s266 = scalar_lea.sflag [#allocation9], %s265
          %s267 = sand.u32 %s114, 1
          %s268 = smul.addr %s267, 128
          %s269 = scalar_lea.vmem [#allocation8], %s268
          %s270 = smul.u32 16, %s22
          %s271 = ssub.s32 25, %s270
          %p272 = scmp.lt.s32.totalorder %s271, 16
          %s273 = scalar_select %p272, %s271, 16
          %s274 = smul.u32 128, %s273
          %s276 = ssub.s32 2048, %s274
          %277 = vsyncadd %s266, %s276
          %p278 = scmp.ne.s32.totalorder 0, %s274
          %s279 = smul.addr %s270, 3
          %s280 = sadd.s32 %s22, %s279
          %s281 = smul.addr %s280, 128
          %s282 = scalar_lea.hbm %s3, %s281
          %s283 = smul.u32 8, %s273
          %s284 = sshll.u32 %s269, 4
          %s285 = int_to_ptr.vmem [resolvable:$true] %s284
          %s286 = sshll.u32 %s283, 4
          %290 = dma.hbm_to_vmem [thread:$0]  (%p278), %s282, %s286, %s285, %s266, 384, 128, 8
        $region32: #{tpu_custom_call.1} parent=15 // pred_fallthru
          _
      $region16: #{tpu_custom_call.1} parent=5 // pred_fallthru
        _
      %p291 = scmp.le.s32.totalorder 1, %s22
      %p292 = scmp.lt.s32.totalorder %s22, 3
      %p293 = pnand %p291, %p292
      %p294 = pneg %p293
      // Predicated region
      $region33: #{tpu_custom_call.1} parent=5 // pred_check
        _
      $region34: #{tpu_custom_call.1} parent=5 // pred_check_branch
        %296 = sbr.rel (%p293) target = $region36
      $region35: #{tpu_custom_call.1} parent=5 // pred_region
        %s297 = ssub.s32 %s22, 1
        %s298 = sand.u32 %s35, 1
        %s299 = scalar_lea.sflag [#allocation3], %s298
        %s300 = sand.u32 %s35, 1
        %s301 = smul.addr %s300, 384
        %s302 = scalar_lea.vmem [#allocation2], %s301
        // Predicated region
        $region37: #{tpu_custom_call.1} parent=35 // pred_check
          %p303 = pneg %p48
        $region38: #{tpu_custom_call.1} parent=35 // pred_check_branch
          %305 = sbr.rel (%p303) target = $region40
        $region39: #{tpu_custom_call.1} parent=35 // pred_region
          %306 = dma.done %s299, 6144
        $region40: #{tpu_custom_call.1} parent=35 // pred_fallthru
          _
        %s307 = sand.u32 %s27, 1
        %s308 = scalar_lea.sflag [#allocation6], %s307
        %s309 = sand.u32 %s61, 1
        %s310 = smul.addr %s309, 384
        %s311 = scalar_lea.vmem [#allocation5], %s310
        // Predicated region
        $region41: #{tpu_custom_call.1} parent=35 // pred_check
          %p312 = pneg %p74
        $region42: #{tpu_custom_call.1} parent=35 // pred_check_branch
          %314 = sbr.rel (%p312) target = $region44
        $region43: #{tpu_custom_call.1} parent=35 // pred_region
          %315 = dma.done %s308, 6144
        $region44: #{tpu_custom_call.1} parent=35 // pred_fallthru
          _
        %s316 = sand.u32 %s27, 1
        %s317 = scalar_lea.sflag [#allocation6], %s316
        %s318 = sand.u32 %s89, 1
        %s319 = smul.addr %s318, 128
        %s320 = scalar_lea.vmem [#allocation7], %s319
        // Predicated region
        $region45: #{tpu_custom_call.1} parent=35 // pred_check
          %p321 = pneg %p102
        $region46: #{tpu_custom_call.1} parent=35 // pred_check_branch
          %323 = sbr.rel (%p321) target = $region48
        $region47: #{tpu_custom_call.1} parent=35 // pred_region
          %324 = dma.done %s317, 2048
        $region48: #{tpu_custom_call.1} parent=35 // pred_fallthru
          _
        %s325 = sand.u32 %s117, 1
        %s326 = scalar_lea.sflag [#allocation9], %s325
        %s327 = sand.u32 %s117, 1
        %s328 = smul.addr %s327, 128
        %s329 = scalar_lea.vmem [#allocation8], %s328
        // Predicated region
        $region49: #{tpu_custom_call.1} parent=35 // pred_check
          %p330 = pneg %p130
        $region50: #{tpu_custom_call.1} parent=35 // pred_check_branch
          %332 = sbr.rel (%p330) target = $region52
        $region51: #{tpu_custom_call.1} parent=35 // pred_region
          %333 = dma.done %s326, 2048
        $region52: #{tpu_custom_call.1} parent=35 // pred_fallthru
          _
        %s334 = sand.u32 %s35, 1
        %s335 = scalar_lea.sflag [#allocation3], %s334
        %s336 = sand.u32 %s35, 1
        %s337 = smul.addr %s336, 384
        %s338 = scalar_lea.vmem [#allocation2], %s337
        %p339 = pneg %p48
        %p340 = pneg %p45
        %s341 = sand.u32 %s27, 1
        %s342 = scalar_lea.sflag [#allocation6], %s341
        %s343 = sand.u32 %s61, 1
        %s344 = smul.addr %s343, 384
        %s345 = scalar_lea.vmem [#allocation5], %s344
        %p346 = pneg %p74
        %p347 = pneg %p71
        %s348 = sand.u32 %s27, 1
        %s349 = scalar_lea.sflag [#allocation6], %s348
        %s350 = sand.u32 %s89, 1
        %s351 = smul.addr %s350, 128
        %s352 = scalar_lea.vmem [#allocation7], %s351
        %p353 = pneg %p102
        %p354 = pneg %p99
        %s355 = sand.u32 %s117, 1
        %s356 = scalar_lea.sflag [#allocation9], %s355
        %s357 = sand.u32 %s117, 1
        %s358 = smul.addr %s357, 128
        %s359 = scalar_lea.vmem [#allocation8], %s358
        %p360 = pneg %p130
        %p361 = pneg %p127
        %p362 = pneg %p156
        %p363 = pneg %p153
        %s364 = sand.u32 %s143, 1
        %s365 = scalar_lea.sflag [#allocation4], %s364
        %s366 = sand.u32 %s143, 1
        %s367 = smul.addr %s366, 8
        %s368 = scalar_lea.vmem [#allocation10], %s367
        %s369 = smul.u32 16, %s27
        %s370 = ssub.s32 25, %s369
        %p371 = scmp.lt.s32.totalorder %s370, 16
        %s372 = scalar_select %p371, %s370, 16
        %s373 = smul.u32 128, %s372
        %s374 = smul.u32 %s373, 3
        %s375 = smul.u32 16, %s27
        %s376 = ssub.s32 25, %s375
        %p377 = scmp.lt.s32.totalorder %s376, 16
        %s378 = scalar_select %p377, %s376, 16
        %s379 = smul.u32 128, %s378
        %s380 = smul.u32 %s379, 3
        %s381 = smul.u32 16, %s27
        %s382 = ssub.s32 25, %s381
        %p383 = scmp.lt.s32.totalorder %s382, 16
        %s384 = scalar_select %p383, %s382, 16
        %s385 = smul.u32 128, %s384
        %s386 = smul.u32 16, %s27
        %s387 = ssub.s32 25, %s386
        %p388 = scmp.lt.s32.totalorder %s387, 16
        %s389 = scalar_select %p388, %s387, 16
        %s390 = smul.u32 128, %s389
        %s391 = smul.u32 %s27, 128
        %v392 = vlaneseq
        %v393 = vshrl.u32 %v392, 7
        %v394 = vadd.s32 %v393, 8
        %v395 = vadd.s32 %v393, 16
        %v396 = vadd.s32 %v393, 24
        %v397 = vadd.s32 %v393, 32
        %v398 = vadd.s32 %v393, 40
        %v399 = vadd.s32 %v393, 48
        %v400 = vadd.s32 %v393, 56
        %v401 = vadd.s32 %v393, 64
        %v402 = vadd.s32 %v393, 72
        %v403 = vadd.s32 %v393, 80
        %v404 = vadd.s32 %v393, 88
        %v405 = vadd.s32 %v393, 96
        %v406 = vadd.s32 %v393, 104
        %v407 = vadd.s32 %v393, 112
        %v408 = vadd.s32 %v393, 120
        %v409 = vstv %s391
        %v410 = vadd.s32 %v393, %v409
        %v411 = vadd.s32 %v394, %v409
        %v412 = vadd.s32 %v395, %v409
        %v413 = vadd.s32 %v396, %v409
        %v414 = vadd.s32 %v397, %v409
        %v415 = vadd.s32 %v398, %v409
        %v416 = vadd.s32 %v399, %v409
        %v417 = vadd.s32 %v400, %v409
        %v418 = vadd.s32 %v401, %v409
        %v419 = vadd.s32 %v402, %v409
        %v420 = vadd.s32 %v403, %v409
        %v421 = vadd.s32 %v404, %v409
        %v422 = vadd.s32 %v405, %v409
        %v423 = vadd.s32 %v406, %v409
        %v424 = vadd.s32 %v407, %v409
        %v425 = vadd.s32 %v408, %v409
        %vm426 = vcmp.lt.s32.totalorder %v410, 200
        %vm427 = vcmp.lt.s32.totalorder %v411, 200
        %vm428 = vcmp.lt.s32.totalorder %v412, 200
        %vm429 = vcmp.lt.s32.totalorder %v413, 200
        %vm430 = vcmp.lt.s32.totalorder %v414, 200
        %vm431 = vcmp.lt.s32.totalorder %v415, 200
        %vm432 = vcmp.lt.s32.totalorder %v416, 200
        %vm433 = vcmp.lt.s32.totalorder %v417, 200
        %vm434 = vcmp.lt.s32.totalorder %v418, 200
        %vm435 = vcmp.lt.s32.totalorder %v419, 200
        %vm436 = vcmp.lt.s32.totalorder %v420, 200
        %vm437 = vcmp.lt.s32.totalorder %v421, 200
        %vm438 = vcmp.lt.s32.totalorder %v422, 200
        %vm439 = vcmp.lt.s32.totalorder %v423, 200
        %vm440 = vcmp.lt.s32.totalorder %v424, 200
        %vm441 = vcmp.lt.s32.totalorder %v425, 200
        %v442 = vlaneseq
        %v443 = vand.u32 %v442, 127
        %vm444 = vcmp.eq.s32.totalorder %v443, %v393
        %vm445 = vcmp.eq.s32.totalorder %v443, %v394
        %vm446 = vcmp.eq.s32.totalorder %v443, %v395
        %vm447 = vcmp.eq.s32.totalorder %v443, %v396
        %vm448 = vcmp.eq.s32.totalorder %v443, %v397
        %vm449 = vcmp.eq.s32.totalorder %v443, %v398
        %vm450 = vcmp.eq.s32.totalorder %v443, %v399
        %vm451 = vcmp.eq.s32.totalorder %v443, %v400
        %vm452 = vcmp.eq.s32.totalorder %v443, %v401
        %vm453 = vcmp.eq.s32.totalorder %v443, %v402
        %vm454 = vcmp.eq.s32.totalorder %v443, %v403
        %vm455 = vcmp.eq.s32.totalorder %v443, %v404
        %vm456 = vcmp.eq.s32.totalorder %v443, %v405
        %vm457 = vcmp.eq.s32.totalorder %v443, %v406
        %vm458 = vcmp.eq.s32.totalorder %v443, %v407
        %vm459 = vcmp.eq.s32.totalorder %v443, %v408
        %v460 = vld [vmem:[%s302] sm:$0xff]
        %v461 = vld [vmem:[%s302 + $0x8] sm:$0xff]
        %v462 = vld [vmem:[%s302 + $0x10] sm:$0xff]
        %v463 = vld [vmem:[%s302 + $0x18] sm:$0xff]
        %v464 = vld [vmem:[%s302 + $0x20] sm:$0xff]
        %v465 = vld [vmem:[%s302 + $0x28] sm:$0xff]
        %v466 = vld [vmem:[%s302 + $0x30] sm:$0xff]
        %v467 = vld [vmem:[%s302 + $0x38] sm:$0xff]
        %v468 = vld [vmem:[%s302 + $0x40] sm:$0xff]
        %v469 = vld [vmem:[%s302 + $0x48] sm:$0xff]
        %v470 = vld [vmem:[%s302 + $0x50] sm:$0xff]
        %v471 = vld [vmem:[%s302 + $0x58] sm:$0xff]
        %v472 = vld [vmem:[%s302 + $0x60] sm:$0xff]
        %v473 = vld [vmem:[%s302 + $0x68] sm:$0xff]
        %v474 = vld [vmem:[%s302 + $0x70] sm:$0xff]
        %v475 = vld [vmem:[%s302 + $0x78] sm:$0xff]
        %v476 = vld [vmem:[%s302 + $0x80] sm:$0xff]
        %v477 = vld [vmem:[%s302 + $0x88] sm:$0xff]
        %v478 = vld [vmem:[%s302 + $0x90] sm:$0xff]
        %v479 = vld [vmem:[%s302 + $0x98] sm:$0xff]
        %v480 = vld [vmem:[%s302 + $0xa0] sm:$0xff]
        %v481 = vld [vmem:[%s302 + $0xa8] sm:$0xff]
        %v482 = vld [vmem:[%s302 + $0xb0] sm:$0xff]
        %v483 = vld [vmem:[%s302 + $0xb8] sm:$0xff]
        %v484 = vld [vmem:[%s302 + $0xc0] sm:$0xff]
        %v485 = vld [vmem:[%s302 + $0xc8] sm:$0xff]
        %v486 = vld [vmem:[%s302 + $0xd0] sm:$0xff]
        %v487 = vld [vmem:[%s302 + $0xd8] sm:$0xff]
        %v488 = vld [vmem:[%s302 + $0xe0] sm:$0xff]
        %v489 = vld [vmem:[%s302 + $0xe8] sm:$0xff]
        %v490 = vld [vmem:[%s302 + $0xf0] sm:$0xff]
        %v491 = vld [vmem:[%s302 + $0xf8] sm:$0xff]
        %v492 = vld [vmem:[%s302 + $0x100] sm:$0xff]
        %v493 = vld [vmem:[%s302 + $0x108] sm:$0xff]
        %v494 = vld [vmem:[%s302 + $0x110] sm:$0xff]
        %v495 = vld [vmem:[%s302 + $0x118] sm:$0xff]
        %v496 = vld [vmem:[%s302 + $0x120] sm:$0xff]
        %v497 = vld [vmem:[%s302 + $0x128] sm:$0xff]
        %v498 = vld [vmem:[%s302 + $0x130] sm:$0xff]
        %v499 = vld [vmem:[%s302 + $0x138] sm:$0xff]
        %v500 = vld [vmem:[%s302 + $0x140] sm:$0xff]
        %v501 = vld [vmem:[%s302 + $0x148] sm:$0xff]
        %v502 = vld [vmem:[%s302 + $0x150] sm:$0xff]
        %v503 = vld [vmem:[%s302 + $0x158] sm:$0xff]
        %v504 = vld [vmem:[%s302 + $0x160] sm:$0xff]
        %v505 = vld [vmem:[%s302 + $0x168] sm:$0xff]
        %v506 = vld [vmem:[%s302 + $0x170] sm:$0xff]
        %v507 = vld [vmem:[%s302 + $0x178] sm:$0xff]
        %v508 = vmax.f32 %v460, %v461
        %vm509 = vcmask 523264
        %v510 = vsel %vm509, %v462, -inf
        %v511 = vmax.f32 %v508, %v510
        %512 = vmax.xlane.f32.xlu0 %v511
        %v513 = vpop.xlane.xlu0 %512
        %v514 = vmax.f32 %v463, %v464
        %v515 = vsel %vm509, %v465, -inf
        %v516 = vmax.f32 %v514, %v515
        %517 = vmax.xlane.f32.xlu0 %v516
        %v518 = vpop.xlane.xlu0 %517
        %v519 = vmax.f32 %v466, %v467
        %v520 = vsel %vm509, %v468, -inf
        %v521 = vmax.f32 %v519, %v520
        %522 = vmax.xlane.f32.xlu0 %v521
        %v523 = vpop.xlane.xlu0 %522
        %v524 = vmax.f32 %v469, %v470
        %v525 = vsel %vm509, %v471, -inf
        %v526 = vmax.f32 %v524, %v525
        %527 = vmax.xlane.f32.xlu0 %v526
        %v528 = vpop.xlane.xlu0 %527
        %v529 = vmax.f32 %v472, %v473
        %v530 = vsel %vm509, %v474, -inf
        %v531 = vmax.f32 %v529, %v530
        %532 = vmax.xlane.f32.xlu0 %v531
        %v533 = vpop.xlane.xlu0 %532
        %v534 = vmax.f32 %v475, %v476
        %v535 = vsel %vm509, %v477, -inf
        %v536 = vmax.f32 %v534, %v535
        %537 = vmax.xlane.f32.xlu0 %v536
        %v538 = vpop.xlane.xlu0 %537
        %v539 = vmax.f32 %v478, %v479
        %v540 = vsel %vm509, %v480, -inf
        %v541 = vmax.f32 %v539, %v540
        %542 = vmax.xlane.f32.xlu0 %v541
        %v543 = vpop.xlane.xlu0 %542
        %v544 = vmax.f32 %v481, %v482
        %v545 = vsel %vm509, %v483, -inf
        %v546 = vmax.f32 %v544, %v545
        %547 = vmax.xlane.f32.xlu0 %v546
        %v548 = vpop.xlane.xlu0 %547
        %v549 = vmax.f32 %v484, %v485
        %v550 = vsel %vm509, %v486, -inf
        %v551 = vmax.f32 %v549, %v550
        %552 = vmax.xlane.f32.xlu0 %v551
        %v553 = vpop.xlane.xlu0 %552
        %v554 = vmax.f32 %v487, %v488
        %v555 = vsel %vm509, %v489, -inf
        %v556 = vmax.f32 %v554, %v555
        %557 = vmax.xlane.f32.xlu0 %v556
        %v558 = vpop.xlane.xlu0 %557
        %v559 = vmax.f32 %v490, %v491
        %v560 = vsel %vm509, %v492, -inf
        %v561 = vmax.f32 %v559, %v560
        %562 = vmax.xlane.f32.xlu0 %v561
        %v563 = vpop.xlane.xlu0 %562
        %v564 = vmax.f32 %v493, %v494
        %v565 = vsel %vm509, %v495, -inf
        %v566 = vmax.f32 %v564, %v565
        %567 = vmax.xlane.f32.xlu0 %v566
        %v568 = vpop.xlane.xlu0 %567
        %v569 = vmax.f32 %v496, %v497
        %v570 = vsel %vm509, %v498, -inf
        %v571 = vmax.f32 %v569, %v570
        %572 = vmax.xlane.f32.xlu0 %v571
        %v573 = vpop.xlane.xlu0 %572
        %v574 = vmax.f32 %v499, %v500
        %v575 = vsel %vm509, %v501, -inf
        %v576 = vmax.f32 %v574, %v575
        %577 = vmax.xlane.f32.xlu0 %v576
        %v578 = vpop.xlane.xlu0 %577
        %v579 = vmax.f32 %v502, %v503
        %v580 = vsel %vm509, %v504, -inf
        %v581 = vmax.f32 %v579, %v580
        %582 = vmax.xlane.f32.xlu0 %v581
        %v583 = vpop.xlane.xlu0 %582
        %v584 = vmax.f32 %v505, %v506
        %v585 = vsel %vm509, %v507, -inf
        %v586 = vmax.f32 %v584, %v585
        %587 = vmax.xlane.f32.xlu0 %v586
        %v588 = vpop.xlane.xlu0 %587
        %v589 = vsub.f32 %v460, %v513
        %v590 = vsub.f32 %v461, %v513
        %v591 = vsub.f32 %v462, %v513
        %v592 = vsub.f32 %v463, %v518
        %v593 = vsub.f32 %v464, %v518
        %v594 = vsub.f32 %v465, %v518
        %v595 = vsub.f32 %v466, %v523
        %v596 = vsub.f32 %v467, %v523
        %v597 = vsub.f32 %v468, %v523
        %v598 = vsub.f32 %v469, %v528
        %v599 = vsub.f32 %v470, %v528
        %v600 = vsub.f32 %v471, %v528
        %v601 = vsub.f32 %v472, %v533
        %v602 = vsub.f32 %v473, %v533
        %v603 = vsub.f32 %v474, %v533
        %v604 = vsub.f32 %v475, %v538
        %v605 = vsub.f32 %v476, %v538
        %v606 = vsub.f32 %v477, %v538
        %v607 = vsub.f32 %v478, %v543
        %v608 = vsub.f32 %v479, %v543
        %v609 = vsub.f32 %v480, %v543
        %v610 = vsub.f32 %v481, %v548
        %v611 = vsub.f32 %v482, %v548
        %v612 = vsub.f32 %v483, %v548
        %v613 = vsub.f32 %v484, %v553
        %v614 = vsub.f32 %v485, %v553
        %v615 = vsub.f32 %v486, %v553
        %v616 = vsub.f32 %v487, %v558
        %v617 = vsub.f32 %v488, %v558
        %v618 = vsub.f32 %v489, %v558
        %v619 = vsub.f32 %v490, %v563
        %v620 = vsub.f32 %v491, %v563
        %v621 = vsub.f32 %v492, %v563
        %v622 = vsub.f32 %v493, %v568
        %v623 = vsub.f32 %v494, %v568
        %v624 = vsub.f32 %v495, %v568
        %v625 = vsub.f32 %v496, %v573
        %v626 = vsub.f32 %v497, %v573
        %v627 = vsub.f32 %v498, %v573
        %v628 = vsub.f32 %v499, %v578
        %v629 = vsub.f32 %v500, %v578
        %v630 = vsub.f32 %v501, %v578
        %v631 = vsub.f32 %v502, %v583
        %v632 = vsub.f32 %v503, %v583
        %v633 = vsub.f32 %v504, %v583
        %v634 = vsub.f32 %v505, %v588
        %v635 = vsub.f32 %v506, %v588
        %v636 = vsub.f32 %v507, %v588
        %v637 = vmul.f32 %v589, 1.442695
        %v638 = vpow.pop %v637
        %v639 = vmul.f32 %v590, 1.442695
        %v640 = vpow.pop %v639
        %v641 = vmul.f32 %v591, 1.442695
        %v642 = vpow.pop %v641
        %v643 = vmul.f32 %v592, 1.442695
        %v644 = vpow.pop %v643
        %v645 = vmul.f32 %v593, 1.442695
        %v646 = vpow.pop %v645
        %v647 = vmul.f32 %v594, 1.442695
        %v648 = vpow.pop %v647
        %v649 = vmul.f32 %v595, 1.442695
        %v650 = vpow.pop %v649
        %v651 = vmul.f32 %v596, 1.442695
        %v652 = vpow.pop %v651
        %v653 = vmul.f32 %v597, 1.442695
        %v654 = vpow.pop %v653
        %v655 = vmul.f32 %v598, 1.442695
        %v656 = vpow.pop %v655
        %v657 = vmul.f32 %v599, 1.442695
        %v658 = vpow.pop %v657
        %v659 = vmul.f32 %v600, 1.442695
        %v660 = vpow.pop %v659
        %v661 = vmul.f32 %v601, 1.442695
        %v662 = vpow.pop %v661
        %v663 = vmul.f32 %v602, 1.442695
        %v664 = vpow.pop %v663
        %v665 = vmul.f32 %v603, 1.442695
        %v666 = vpow.pop %v665
        %v667 = vmul.f32 %v604, 1.442695
        %v668 = vpow.pop %v667
        %v669 = vmul.f32 %v605, 1.442695
        %v670 = vpow.pop %v669
        %v671 = vmul.f32 %v606, 1.442695
        %v672 = vpow.pop %v671
        %v673 = vmul.f32 %v607, 1.442695
        %v674 = vpow.pop %v673
        %v675 = vmul.f32 %v608, 1.442695
        %v676 = vpow.pop %v675
        %v677 = vmul.f32 %v609, 1.442695
        %v678 = vpow.pop %v677
        %v679 = vmul.f32 %v610, 1.442695
        %v680 = vpow.pop %v679
        %v681 = vmul.f32 %v611, 1.442695
        %v682 = vpow.pop %v681
        %v683 = vmul.f32 %v612, 1.442695
        %v684 = vpow.pop %v683
        %v685 = vmul.f32 %v613, 1.442695
        %v686 = vpow.pop %v685
        %v687 = vmul.f32 %v614, 1.442695
        %v688 = vpow.pop %v687
        %v689 = vmul.f32 %v615, 1.442695
        %v690 = vpow.pop %v689
        %v691 = vmul.f32 %v616, 1.442695
        %v692 = vpow.pop %v691
        %v693 = vmul.f32 %v617, 1.442695
        %v694 = vpow.pop %v693
        %v695 = vmul.f32 %v618, 1.442695
        %v696 = vpow.pop %v695
        %v697 = vmul.f32 %v619, 1.442695
        %v698 = vpow.pop %v697
        %v699 = vmul.f32 %v620, 1.442695
        %v700 = vpow.pop %v699
        %v701 = vmul.f32 %v621, 1.442695
        %v702 = vpow.pop %v701
        %v703 = vmul.f32 %v622, 1.442695
        %v704 = vpow.pop %v703
        %v705 = vmul.f32 %v623, 1.442695
        %v706 = vpow.pop %v705
        %v707 = vmul.f32 %v624, 1.442695
        %v708 = vpow.pop %v707
        %v709 = vmul.f32 %v625, 1.442695
        %v710 = vpow.pop %v709
        %v711 = vmul.f32 %v626, 1.442695
        %v712 = vpow.pop %v711
        %v713 = vmul.f32 %v627, 1.442695
        %v714 = vpow.pop %v713
        %v715 = vmul.f32 %v628, 1.442695
        %v716 = vpow.pop %v715
        %v717 = vmul.f32 %v629, 1.442695
        %v718 = vpow.pop %v717
        %v719 = vmul.f32 %v630, 1.442695
        %v720 = vpow.pop %v719
        %v721 = vmul.f32 %v631, 1.442695
        %v722 = vpow.pop %v721
        %v723 = vmul.f32 %v632, 1.442695
        %v724 = vpow.pop %v723
        %v725 = vmul.f32 %v633, 1.442695
        %v726 = vpow.pop %v725
        %v727 = vmul.f32 %v634, 1.442695
        %v728 = vpow.pop %v727
        %v729 = vmul.f32 %v635, 1.442695
        %v730 = vpow.pop %v729
        %v731 = vmul.f32 %v636, 1.442695
        %v732 = vpow.pop %v731
        %v733 = vadd.f32 %v638, %v640
        %v734 = vsel %vm509, %v642, 0.0
        %v735 = vadd.f32 %v733, %v734
        %736 = vadd.xlane.f32.xlu0 %v735
        %v737 = vpop.xlane.xlu0 %736
        %v738 = vadd.f32 %v644, %v646
        %v739 = vsel %vm509, %v648, 0.0
        %v740 = vadd.f32 %v738, %v739
        %741 = vadd.xlane.f32.xlu0 %v740
        %v742 = vpop.xlane.xlu0 %741
        %v743 = vadd.f32 %v650, %v652
        %v744 = vsel %vm509, %v654, 0.0
        %v745 = vadd.f32 %v743, %v744
        %746 = vadd.xlane.f32.xlu0 %v745
        %v747 = vpop.xlane.xlu0 %746
        %v748 = vadd.f32 %v656, %v658
        %v749 = vsel %vm509, %v660, 0.0
        %v750 = vadd.f32 %v748, %v749
        %751 = vadd.xlane.f32.xlu0 %v750
        %v752 = vpop.xlane.xlu0 %751
        %v753 = vadd.f32 %v662, %v664
        %v754 = vsel %vm509, %v666, 0.0
        %v755 = vadd.f32 %v753, %v754
        %756 = vadd.xlane.f32.xlu0 %v755
        %v757 = vpop.xlane.xlu0 %756
        %v758 = vadd.f32 %v668, %v670
        %v759 = vsel %vm509, %v672, 0.0
        %v760 = vadd.f32 %v758, %v759
        %761 = vadd.xlane.f32.xlu0 %v760
        %v762 = vpop.xlane.xlu0 %761
        %v763 = vadd.f32 %v674, %v676
        %v764 = vsel %vm509, %v678, 0.0
        %v765 = vadd.f32 %v763, %v764
        %766 = vadd.xlane.f32.xlu0 %v765
        %v767 = vpop.xlane.xlu0 %766
        %v768 = vadd.f32 %v680, %v682
        %v769 = vsel %vm509, %v684, 0.0
        %v770 = vadd.f32 %v768, %v769
        %771 = vadd.xlane.f32.xlu0 %v770
        %v772 = vpop.xlane.xlu0 %771
        %v773 = vadd.f32 %v686, %v688
        %v774 = vsel %vm509, %v690, 0.0
        %v775 = vadd.f32 %v773, %v774
        %776 = vadd.xlane.f32.xlu0 %v775
        %v777 = vpop.xlane.xlu0 %776
        %v778 = vadd.f32 %v692, %v694
        %v779 = vsel %vm509, %v696, 0.0
        %v780 = vadd.f32 %v778, %v779
        %781 = vadd.xlane.f32.xlu0 %v780
        %v782 = vpop.xlane.xlu0 %781
        %v783 = vadd.f32 %v698, %v700
        %v784 = vsel %vm509, %v702, 0.0
        %v785 = vadd.f32 %v783, %v784
        %786 = vadd.xlane.f32.xlu0 %v785
        %v787 = vpop.xlane.xlu0 %786
        %v788 = vadd.f32 %v704, %v706
        %v789 = vsel %vm509, %v708, 0.0
        %v790 = vadd.f32 %v788, %v789
        %791 = vadd.xlane.f32.xlu0 %v790
        %v792 = vpop.xlane.xlu0 %791
        %v793 = vadd.f32 %v710, %v712
        %v794 = vsel %vm509, %v714, 0.0
        %v795 = vadd.f32 %v793, %v794
        %796 = vadd.xlane.f32.xlu0 %v795
        %v797 = vpop.xlane.xlu0 %796
        %v798 = vadd.f32 %v716, %v718
        %v799 = vsel %vm509, %v720, 0.0
        %v800 = vadd.f32 %v798, %v799
        %801 = vadd.xlane.f32.xlu0 %v800
        %v802 = vpop.xlane.xlu0 %801
        %v803 = vadd.f32 %v722, %v724
        %v804 = vsel %vm509, %v726, 0.0
        %v805 = vadd.f32 %v803, %v804
        %806 = vadd.xlane.f32.xlu0 %v805
        %v807 = vpop.xlane.xlu0 %806
        %v808 = vadd.f32 %v728, %v730
        %v809 = vsel %vm509, %v732, 0.0
        %v810 = vadd.f32 %v808, %v809
        %811 = vadd.xlane.f32.xlu0 %v810
        %v812 = vpop.xlane.xlu0 %811
        %v813 = vlog2.pop %v737
        %v814 = vmul.f32 %v813, 0.6931472
        %v815 = vlog2.pop %v742
        %v816 = vmul.f32 %v815, 0.6931472
        %v817 = vlog2.pop %v747
        %v818 = vmul.f32 %v817, 0.6931472
        %v819 = vlog2.pop %v752
        %v820 = vmul.f32 %v819, 0.6931472
        %v821 = vlog2.pop %v757
        %v822 = vmul.f32 %v821, 0.6931472
        %v823 = vlog2.pop %v762
        %v824 = vmul.f32 %v823, 0.6931472
        %v825 = vlog2.pop %v767
        %v826 = vmul.f32 %v825, 0.6931472
        %v827 = vlog2.pop %v772
        %v828 = vmul.f32 %v827, 0.6931472
        %v829 = vlog2.pop %v777
        %v830 = vmul.f32 %v829, 0.6931472
        %v831 = vlog2.pop %v782
        %v832 = vmul.f32 %v831, 0.6931472
        %v833 = vlog2.pop %v787
        %v834 = vmul.f32 %v833, 0.6931472
        %v835 = vlog2.pop %v792
        %v836 = vmul.f32 %v835, 0.6931472
        %v837 = vlog2.pop %v797
        %v838 = vmul.f32 %v837, 0.6931472
        %v839 = vlog2.pop %v802
        %v840 = vmul.f32 %v839, 0.6931472
        %v841 = vlog2.pop %v807
        %v842 = vmul.f32 %v841, 0.6931472
        %v843 = vlog2.pop %v812
        %v844 = vmul.f32 %v843, 0.6931472
        %v845 = vadd.f32 %v814, %v513
        %v846 = vadd.f32 %v816, %v518
        %v847 = vadd.f32 %v818, %v523
        %v848 = vadd.f32 %v820, %v528
        %v849 = vadd.f32 %v822, %v533
        %v850 = vadd.f32 %v824, %v538
        %v851 = vadd.f32 %v826, %v543
        %v852 = vadd.f32 %v828, %v548
        %v853 = vadd.f32 %v830, %v553
        %v854 = vadd.f32 %v832, %v558
        %v855 = vadd.f32 %v834, %v563
        %v856 = vadd.f32 %v836, %v568
        %v857 = vadd.f32 %v838, %v573
        %v858 = vadd.f32 %v840, %v578
        %v859 = vadd.f32 %v842, %v583
        %v860 = vadd.f32 %v844, %v588
        %v861 = vld [vmem:[%s320] sm:$0xff]
        %v862 = vld [vmem:[%s320 + $0x8] sm:$0xff]
        %v863 = vld [vmem:[%s320 + $0x10] sm:$0xff]
        %v864 = vld [vmem:[%s320 + $0x18] sm:$0xff]
        %v865 = vld [vmem:[%s320 + $0x20] sm:$0xff]
        %v866 = vld [vmem:[%s320 + $0x28] sm:$0xff]
        %v867 = vld [vmem:[%s320 + $0x30] sm:$0xff]
        %v868 = vld [vmem:[%s320 + $0x38] sm:$0xff]
        %v869 = vld [vmem:[%s320 + $0x40] sm:$0xff]
        %v870 = vld [vmem:[%s320 + $0x48] sm:$0xff]
        %v871 = vld [vmem:[%s320 + $0x50] sm:$0xff]
        %v872 = vld [vmem:[%s320 + $0x58] sm:$0xff]
        %v873 = vld [vmem:[%s320 + $0x60] sm:$0xff]
        %v874 = vld [vmem:[%s320 + $0x68] sm:$0xff]
        %v875 = vld [vmem:[%s320 + $0x70] sm:$0xff]
        %v876 = vld [vmem:[%s320 + $0x78] sm:$0xff]
        %v877 = vsel %vm444, %v861, 0.0
        %v878 = vsel %vm445, %v862, 0.0
        %v879 = vsel %vm446, %v863, 0.0
        %v880 = vsel %vm447, %v864, 0.0
        %v881 = vsel %vm448, %v865, 0.0
        %v882 = vsel %vm449, %v866, 0.0
        %v883 = vsel %vm450, %v867, 0.0
        %v884 = vsel %vm451, %v868, 0.0
        %v885 = vsel %vm452, %v869, 0.0
        %v886 = vsel %vm453, %v870, 0.0
        %v887 = vsel %vm454, %v871, 0.0
        %v888 = vsel %vm455, %v872, 0.0
        %v889 = vsel %vm456, %v873, 0.0
        %v890 = vsel %vm457, %v874, 0.0
        %v891 = vsel %vm458, %v875, 0.0
        %v892 = vsel %vm459, %v876, 0.0
        %893 = vadd.xlane.f32.xlu0 %v877
        %v894 = vpop.xlane.xlu0 %893
        %895 = vadd.xlane.f32.xlu0 %v878
        %v896 = vpop.xlane.xlu0 %895
        %897 = vadd.xlane.f32.xlu0 %v879
        %v898 = vpop.xlane.xlu0 %897
        %899 = vadd.xlane.f32.xlu0 %v880
        %v900 = vpop.xlane.xlu0 %899
        %901 = vadd.xlane.f32.xlu0 %v881
        %v902 = vpop.xlane.xlu0 %901
        %903 = vadd.xlane.f32.xlu0 %v882
        %v904 = vpop.xlane.xlu0 %903
        %905 = vadd.xlane.f32.xlu0 %v883
        %v906 = vpop.xlane.xlu0 %905
        %907 = vadd.xlane.f32.xlu0 %v884
        %v908 = vpop.xlane.xlu0 %907
        %909 = vadd.xlane.f32.xlu0 %v885
        %v910 = vpop.xlane.xlu0 %909
        %911 = vadd.xlane.f32.xlu0 %v886
        %v912 = vpop.xlane.xlu0 %911
        %913 = vadd.xlane.f32.xlu0 %v887
        %v914 = vpop.xlane.xlu0 %913
        %915 = vadd.xlane.f32.xlu0 %v888
        %v916 = vpop.xlane.xlu0 %915
        %917 = vadd.xlane.f32.xlu0 %v889
        %v918 = vpop.xlane.xlu0 %917
        %919 = vadd.xlane.f32.xlu0 %v890
        %v920 = vpop.xlane.xlu0 %919
        %921 = vadd.xlane.f32.xlu0 %v891
        %v922 = vpop.xlane.xlu0 %921
        %923 = vadd.xlane.f32.xlu0 %v892
        %v924 = vpop.xlane.xlu0 %923
        %v925 = vsub.f32 %v845, %v894
        %v926 = vsub.f32 %v846, %v896
        %v927 = vsub.f32 %v847, %v898
        %v928 = vsub.f32 %v848, %v900
        %v929 = vsub.f32 %v849, %v902
        %v930 = vsub.f32 %v850, %v904
        %v931 = vsub.f32 %v851, %v906
        %v932 = vsub.f32 %v852, %v908
        %v933 = vsub.f32 %v853, %v910
        %v934 = vsub.f32 %v854, %v912
        %v935 = vsub.f32 %v855, %v914
        %v936 = vsub.f32 %v856, %v916
        %v937 = vsub.f32 %v857, %v918
        %v938 = vsub.f32 %v858, %v920
        %v939 = vsub.f32 %v859, %v922
        %v940 = vsub.f32 %v860, %v924
        %v941 = vsel %vm426, %v925, 0.0
        %v942 = vsel %vm427, %v926, 0.0
        %v943 = vsel %vm428, %v927, 0.0
        %v944 = vsel %vm429, %v928, 0.0
        %v945 = vsel %vm430, %v929, 0.0
        %v946 = vsel %vm431, %v930, 0.0
        %v947 = vsel %vm432, %v931, 0.0
        %v948 = vsel %vm433, %v932, 0.0
        %v949 = vsel %vm434, %v933, 0.0
        %v950 = vsel %vm435, %v934, 0.0
        %v951 = vsel %vm436, %v935, 0.0
        %v952 = vsel %vm437, %v936, 0.0
        %v953 = vsel %vm438, %v937, 0.0
        %v954 = vsel %vm439, %v938, 0.0
        %v955 = vsel %vm440, %v939, 0.0
        %v956 = vsel %vm441, %v940, 0.0
        %vm957 = vcmask 7168
        %v958 = vsel %vm957, %v941, 0.0
        %v959 = vsel %vm957, %v942, 0.0
        %v960 = vadd.f32 %v958, %v959
        %v961 = vsel %vm957, %v943, 0.0
        %v962 = vadd.f32 %v960, %v961
        %v963 = vsel %vm957, %v944, 0.0
        %v964 = vadd.f32 %v962, %v963
        %v965 = vsel %vm957, %v945, 0.0
        %v966 = vadd.f32 %v964, %v965
        %v967 = vsel %vm957, %v946, 0.0
        %v968 = vadd.f32 %v966, %v967
        %v969 = vsel %vm957, %v947, 0.0
        %v970 = vadd.f32 %v968, %v969
        %v971 = vsel %vm957, %v948, 0.0
        %v972 = vadd.f32 %v970, %v971
        %v973 = vsel %vm957, %v949, 0.0
        %v974 = vadd.f32 %v972, %v973
        %v975 = vsel %vm957, %v950, 0.0
        %v976 = vadd.f32 %v974, %v975
        %v977 = vsel %vm957, %v951, 0.0
        %v978 = vadd.f32 %v976, %v977
        %v979 = vsel %vm957, %v952, 0.0
        %v980 = vadd.f32 %v978, %v979
        %v981 = vsel %vm957, %v953, 0.0
        %v982 = vadd.f32 %v980, %v981
        %v983 = vsel %vm957, %v954, 0.0
        %v984 = vadd.f32 %v982, %v983
        %v985 = vsel %vm957, %v955, 0.0
        %v986 = vadd.f32 %v984, %v985
        %v987 = vsel %vm957, %v956, 0.0
        %v988 = vadd.f32 %v986, %v987
        %989 = vadd.xlane.f32.xlu0 %v988
        %v990 = vpop.xlane.xlu0 %989
        %v991 = vrot.slane %v990, 4
        %v992 = vadd.f32 %v990, %v991
        %v993 = vrot.slane %v992, 2
        %v994 = vadd.f32 %v992, %v993
        %v995 = vrot.slane %v994, 1
        %v996 = vadd.f32 %v994, %v995
        %s997 = vtos %v996
        %v998 = vld [vmem:[%s311] sm:$0xff]
        %v999 = vld [vmem:[%s311 + $0x8] sm:$0xff]
        %v1000 = vld [vmem:[%s311 + $0x10] sm:$0xff]
        %v1001 = vld [vmem:[%s311 + $0x18] sm:$0xff]
        %v1002 = vld [vmem:[%s311 + $0x20] sm:$0xff]
        %v1003 = vld [vmem:[%s311 + $0x28] sm:$0xff]
        %v1004 = vld [vmem:[%s311 + $0x30] sm:$0xff]
        %v1005 = vld [vmem:[%s311 + $0x38] sm:$0xff]
        %v1006 = vld [vmem:[%s311 + $0x40] sm:$0xff]
        %v1007 = vld [vmem:[%s311 + $0x48] sm:$0xff]
        %v1008 = vld [vmem:[%s311 + $0x50] sm:$0xff]
        %v1009 = vld [vmem:[%s311 + $0x58] sm:$0xff]
        %v1010 = vld [vmem:[%s311 + $0x60] sm:$0xff]
        %v1011 = vld [vmem:[%s311 + $0x68] sm:$0xff]
        %v1012 = vld [vmem:[%s311 + $0x70] sm:$0xff]
        %v1013 = vld [vmem:[%s311 + $0x78] sm:$0xff]
        %v1014 = vld [vmem:[%s311 + $0x80] sm:$0xff]
        %v1015 = vld [vmem:[%s311 + $0x88] sm:$0xff]
        %v1016 = vld [vmem:[%s311 + $0x90] sm:$0xff]
        %v1017 = vld [vmem:[%s311 + $0x98] sm:$0xff]
        %v1018 = vld [vmem:[%s311 + $0xa0] sm:$0xff]
        %v1019 = vld [vmem:[%s311 + $0xa8] sm:$0xff]
        %v1020 = vld [vmem:[%s311 + $0xb0] sm:$0xff]
        %v1021 = vld [vmem:[%s311 + $0xb8] sm:$0xff]
        %v1022 = vld [vmem:[%s311 + $0xc0] sm:$0xff]
        %v1023 = vld [vmem:[%s311 + $0xc8] sm:$0xff]
        %v1024 = vld [vmem:[%s311 + $0xd0] sm:$0xff]
        %v1025 = vld [vmem:[%s311 + $0xd8] sm:$0xff]
        %v1026 = vld [vmem:[%s311 + $0xe0] sm:$0xff]
        %v1027 = vld [vmem:[%s311 + $0xe8] sm:$0xff]
        %v1028 = vld [vmem:[%s311 + $0xf0] sm:$0xff]
        %v1029 = vld [vmem:[%s311 + $0xf8] sm:$0xff]
        %v1030 = vld [vmem:[%s311 + $0x100] sm:$0xff]
        %v1031 = vld [vmem:[%s311 + $0x108] sm:$0xff]
        %v1032 = vld [vmem:[%s311 + $0x110] sm:$0xff]
        %v1033 = vld [vmem:[%s311 + $0x118] sm:$0xff]
        %v1034 = vld [vmem:[%s311 + $0x120] sm:$0xff]
        %v1035 = vld [vmem:[%s311 + $0x128] sm:$0xff]
        %v1036 = vld [vmem:[%s311 + $0x130] sm:$0xff]
        %v1037 = vld [vmem:[%s311 + $0x138] sm:$0xff]
        %v1038 = vld [vmem:[%s311 + $0x140] sm:$0xff]
        %v1039 = vld [vmem:[%s311 + $0x148] sm:$0xff]
        %v1040 = vld [vmem:[%s311 + $0x150] sm:$0xff]
        %v1041 = vld [vmem:[%s311 + $0x158] sm:$0xff]
        %v1042 = vld [vmem:[%s311 + $0x160] sm:$0xff]
        %v1043 = vld [vmem:[%s311 + $0x168] sm:$0xff]
        %v1044 = vld [vmem:[%s311 + $0x170] sm:$0xff]
        %v1045 = vld [vmem:[%s311 + $0x178] sm:$0xff]
        %v1046 = vmax.f32 %v998, %v999
        %v1047 = vsel %vm509, %v1000, -inf
        %v1048 = vmax.f32 %v1046, %v1047
        %1049 = vmax.xlane.f32.xlu0 %v1048
        %v1050 = vpop.xlane.xlu0 %1049
        %v1051 = vmax.f32 %v1001, %v1002
        %v1052 = vsel %vm509, %v1003, -inf
        %v1053 = vmax.f32 %v1051, %v1052
        %1054 = vmax.xlane.f32.xlu0 %v1053
        %v1055 = vpop.xlane.xlu0 %1054
        %v1056 = vmax.f32 %v1004, %v1005
        %v1057 = vsel %vm509, %v1006, -inf
        %v1058 = vmax.f32 %v1056, %v1057
        %1059 = vmax.xlane.f32.xlu0 %v1058
        %v1060 = vpop.xlane.xlu0 %1059
        %v1061 = vmax.f32 %v1007, %v1008
        %v1062 = vsel %vm509, %v1009, -inf
        %v1063 = vmax.f32 %v1061, %v1062
        %1064 = vmax.xlane.f32.xlu0 %v1063
        %v1065 = vpop.xlane.xlu0 %1064
        %v1066 = vmax.f32 %v1010, %v1011
        %v1067 = vsel %vm509, %v1012, -inf
        %v1068 = vmax.f32 %v1066, %v1067
        %1069 = vmax.xlane.f32.xlu0 %v1068
        %v1070 = vpop.xlane.xlu0 %1069
        %v1071 = vmax.f32 %v1013, %v1014
        %v1072 = vsel %vm509, %v1015, -inf
        %v1073 = vmax.f32 %v1071, %v1072
        %1074 = vmax.xlane.f32.xlu0 %v1073
        %v1075 = vpop.xlane.xlu0 %1074
        %v1076 = vmax.f32 %v1016, %v1017
        %v1077 = vsel %vm509, %v1018, -inf
        %v1078 = vmax.f32 %v1076, %v1077
        %1079 = vmax.xlane.f32.xlu0 %v1078
        %v1080 = vpop.xlane.xlu0 %1079
        %v1081 = vmax.f32 %v1019, %v1020
        %v1082 = vsel %vm509, %v1021, -inf
        %v1083 = vmax.f32 %v1081, %v1082
        %1084 = vmax.xlane.f32.xlu0 %v1083
        %v1085 = vpop.xlane.xlu0 %1084
        %v1086 = vmax.f32 %v1022, %v1023
        %v1087 = vsel %vm509, %v1024, -inf
        %v1088 = vmax.f32 %v1086, %v1087
        %1089 = vmax.xlane.f32.xlu0 %v1088
        %v1090 = vpop.xlane.xlu0 %1089
        %v1091 = vmax.f32 %v1025, %v1026
        %v1092 = vsel %vm509, %v1027, -inf
        %v1093 = vmax.f32 %v1091, %v1092
        %1094 = vmax.xlane.f32.xlu0 %v1093
        %v1095 = vpop.xlane.xlu0 %1094
        %v1096 = vmax.f32 %v1028, %v1029
        %v1097 = vsel %vm509, %v1030, -inf
        %v1098 = vmax.f32 %v1096, %v1097
        %1099 = vmax.xlane.f32.xlu0 %v1098
        %v1100 = vpop.xlane.xlu0 %1099
        %v1101 = vmax.f32 %v1031, %v1032
        %v1102 = vsel %vm509, %v1033, -inf
        %v1103 = vmax.f32 %v1101, %v1102
        %1104 = vmax.xlane.f32.xlu0 %v1103
        %v1105 = vpop.xlane.xlu0 %1104
        %v1106 = vmax.f32 %v1034, %v1035
        %v1107 = vsel %vm509, %v1036, -inf
        %v1108 = vmax.f32 %v1106, %v1107
        %1109 = vmax.xlane.f32.xlu0 %v1108
        %v1110 = vpop.xlane.xlu0 %1109
        %v1111 = vmax.f32 %v1037, %v1038
        %v1112 = vsel %vm509, %v1039, -inf
        %v1113 = vmax.f32 %v1111, %v1112
        %1114 = vmax.xlane.f32.xlu0 %v1113
        %v1115 = vpop.xlane.xlu0 %1114
        %v1116 = vmax.f32 %v1040, %v1041
        %v1117 = vsel %vm509, %v1042, -inf
        %v1118 = vmax.f32 %v1116, %v1117
        %1119 = vmax.xlane.f32.xlu0 %v1118
        %v1120 = vpop.xlane.xlu0 %1119
        %v1121 = vmax.f32 %v1043, %v1044
        %v1122 = vsel %vm509, %v1045, -inf
        %v1123 = vmax.f32 %v1121, %v1122
        %1124 = vmax.xlane.f32.xlu0 %v1123
        %v1125 = vpop.xlane.xlu0 %1124
        %v1126 = vsub.f32 %v998, %v1050
        %v1127 = vsub.f32 %v999, %v1050
        %v1128 = vsub.f32 %v1000, %v1050
        %v1129 = vsub.f32 %v1001, %v1055
        %v1130 = vsub.f32 %v1002, %v1055
        %v1131 = vsub.f32 %v1003, %v1055
        %v1132 = vsub.f32 %v1004, %v1060
        %v1133 = vsub.f32 %v1005, %v1060
        %v1134 = vsub.f32 %v1006, %v1060
        %v1135 = vsub.f32 %v1007, %v1065
        %v1136 = vsub.f32 %v1008, %v1065
        %v1137 = vsub.f32 %v1009, %v1065
        %v1138 = vsub.f32 %v1010, %v1070
        %v1139 = vsub.f32 %v1011, %v1070
        %v1140 = vsub.f32 %v1012, %v1070
        %v1141 = vsub.f32 %v1013, %v1075
        %v1142 = vsub.f32 %v1014, %v1075
        %v1143 = vsub.f32 %v1015, %v1075
        %v1144 = vsub.f32 %v1016, %v1080
        %v1145 = vsub.f32 %v1017, %v1080
        %v1146 = vsub.f32 %v1018, %v1080
        %v1147 = vsub.f32 %v1019, %v1085
        %v1148 = vsub.f32 %v1020, %v1085
        %v1149 = vsub.f32 %v1021, %v1085
        %v1150 = vsub.f32 %v1022, %v1090
        %v1151 = vsub.f32 %v1023, %v1090
        %v1152 = vsub.f32 %v1024, %v1090
        %v1153 = vsub.f32 %v1025, %v1095
        %v1154 = vsub.f32 %v1026, %v1095
        %v1155 = vsub.f32 %v1027, %v1095
        %v1156 = vsub.f32 %v1028, %v1100
        %v1157 = vsub.f32 %v1029, %v1100
        %v1158 = vsub.f32 %v1030, %v1100
        %v1159 = vsub.f32 %v1031, %v1105
        %v1160 = vsub.f32 %v1032, %v1105
        %v1161 = vsub.f32 %v1033, %v1105
        %v1162 = vsub.f32 %v1034, %v1110
        %v1163 = vsub.f32 %v1035, %v1110
        %v1164 = vsub.f32 %v1036, %v1110
        %v1165 = vsub.f32 %v1037, %v1115
        %v1166 = vsub.f32 %v1038, %v1115
        %v1167 = vsub.f32 %v1039, %v1115
        %v1168 = vsub.f32 %v1040, %v1120
        %v1169 = vsub.f32 %v1041, %v1120
        %v1170 = vsub.f32 %v1042, %v1120
        %v1171 = vsub.f32 %v1043, %v1125
        %v1172 = vsub.f32 %v1044, %v1125
        %v1173 = vsub.f32 %v1045, %v1125
        %v1174 = vmul.f32 %v1126, 1.442695
        %v1175 = vpow.pop %v1174
        %v1176 = vmul.f32 %v1127, 1.442695
        %v1177 = vpow.pop %v1176
        %v1178 = vmul.f32 %v1128, 1.442695
        %v1179 = vpow.pop %v1178
        %v1180 = vmul.f32 %v1129, 1.442695
        %v1181 = vpow.pop %v1180
        %v1182 = vmul.f32 %v1130, 1.442695
        %v1183 = vpow.pop %v1182
        %v1184 = vmul.f32 %v1131, 1.442695
        %v1185 = vpow.pop %v1184
        %v1186 = vmul.f32 %v1132, 1.442695
        %v1187 = vpow.pop %v1186
        %v1188 = vmul.f32 %v1133, 1.442695
        %v1189 = vpow.pop %v1188
        %v1190 = vmul.f32 %v1134, 1.442695
        %v1191 = vpow.pop %v1190
        %v1192 = vmul.f32 %v1135, 1.442695
        %v1193 = vpow.pop %v1192
        %v1194 = vmul.f32 %v1136, 1.442695
        %v1195 = vpow.pop %v1194
        %v1196 = vmul.f32 %v1137, 1.442695
        %v1197 = vpow.pop %v1196
        %v1198 = vmul.f32 %v1138, 1.442695
        %v1199 = vpow.pop %v1198
        %v1200 = vmul.f32 %v1139, 1.442695
        %v1201 = vpow.pop %v1200
        %v1202 = vmul.f32 %v1140, 1.442695
        %v1203 = vpow.pop %v1202
        %v1204 = vmul.f32 %v1141, 1.442695
        %v1205 = vpow.pop %v1204
        %v1206 = vmul.f32 %v1142, 1.442695
        %v1207 = vpow.pop %v1206
        %v1208 = vmul.f32 %v1143, 1.442695
        %v1209 = vpow.pop %v1208
        %v1210 = vmul.f32 %v1144, 1.442695
        %v1211 = vpow.pop %v1210
        %v1212 = vmul.f32 %v1145, 1.442695
        %v1213 = vpow.pop %v1212
        %v1214 = vmul.f32 %v1146, 1.442695
        %v1215 = vpow.pop %v1214
        %v1216 = vmul.f32 %v1147, 1.442695
        %v1217 = vpow.pop %v1216
        %v1218 = vmul.f32 %v1148, 1.442695
        %v1219 = vpow.pop %v1218
        %v1220 = vmul.f32 %v1149, 1.442695
        %v1221 = vpow.pop %v1220
        %v1222 = vmul.f32 %v1150, 1.442695
        %v1223 = vpow.pop %v1222
        %v1224 = vmul.f32 %v1151, 1.442695
        %v1225 = vpow.pop %v1224
        %v1226 = vmul.f32 %v1152, 1.442695
        %v1227 = vpow.pop %v1226
        %v1228 = vmul.f32 %v1153, 1.442695
        %v1229 = vpow.pop %v1228
        %v1230 = vmul.f32 %v1154, 1.442695
        %v1231 = vpow.pop %v1230
        %v1232 = vmul.f32 %v1155, 1.442695
        %v1233 = vpow.pop %v1232
        %v1234 = vmul.f32 %v1156, 1.442695
        %v1235 = vpow.pop %v1234
        %v1236 = vmul.f32 %v1157, 1.442695
        %v1237 = vpow.pop %v1236
        %v1238 = vmul.f32 %v1158, 1.442695
        %v1239 = vpow.pop %v1238
        %v1240 = vmul.f32 %v1159, 1.442695
        %v1241 = vpow.pop %v1240
        %v1242 = vmul.f32 %v1160, 1.442695
        %v1243 = vpow.pop %v1242
        %v1244 = vmul.f32 %v1161, 1.442695
        %v1245 = vpow.pop %v1244
        %v1246 = vmul.f32 %v1162, 1.442695
        %v1247 = vpow.pop %v1246
        %v1248 = vmul.f32 %v1163, 1.442695
        %v1249 = vpow.pop %v1248
        %v1250 = vmul.f32 %v1164, 1.442695
        %v1251 = vpow.pop %v1250
        %v1252 = vmul.f32 %v1165, 1.442695
        %v1253 = vpow.pop %v1252
        %v1254 = vmul.f32 %v1166, 1.442695
        %v1255 = vpow.pop %v1254
        %v1256 = vmul.f32 %v1167, 1.442695
        %v1257 = vpow.pop %v1256
        %v1258 = vmul.f32 %v1168, 1.442695
        %v1259 = vpow.pop %v1258
        %v1260 = vmul.f32 %v1169, 1.442695
        %v1261 = vpow.pop %v1260
        %v1262 = vmul.f32 %v1170, 1.442695
        %v1263 = vpow.pop %v1262
        %v1264 = vmul.f32 %v1171, 1.442695
        %v1265 = vpow.pop %v1264
        %v1266 = vmul.f32 %v1172, 1.442695
        %v1267 = vpow.pop %v1266
        %v1268 = vmul.f32 %v1173, 1.442695
        %v1269 = vpow.pop %v1268
        %v1270 = vadd.f32 %v1175, %v1177
        %v1271 = vsel %vm509, %v1179, 0.0
        %v1272 = vadd.f32 %v1270, %v1271
        %1273 = vadd.xlane.f32.xlu0 %v1272
        %v1274 = vpop.xlane.xlu0 %1273
        %v1275 = vadd.f32 %v1181, %v1183
        %v1276 = vsel %vm509, %v1185, 0.0
        %v1277 = vadd.f32 %v1275, %v1276
        %1278 = vadd.xlane.f32.xlu0 %v1277
        %v1279 = vpop.xlane.xlu0 %1278
        %v1280 = vadd.f32 %v1187, %v1189
        %v1281 = vsel %vm509, %v1191, 0.0
        %v1282 = vadd.f32 %v1280, %v1281
        %1283 = vadd.xlane.f32.xlu0 %v1282
        %v1284 = vpop.xlane.xlu0 %1283
        %v1285 = vadd.f32 %v1193, %v1195
        %v1286 = vsel %vm509, %v1197, 0.0
        %v1287 = vadd.f32 %v1285, %v1286
        %1288 = vadd.xlane.f32.xlu0 %v1287
        %v1289 = vpop.xlane.xlu0 %1288
        %v1290 = vadd.f32 %v1199, %v1201
        %v1291 = vsel %vm509, %v1203, 0.0
        %v1292 = vadd.f32 %v1290, %v1291
        %1293 = vadd.xlane.f32.xlu0 %v1292
        %v1294 = vpop.xlane.xlu0 %1293
        %v1295 = vadd.f32 %v1205, %v1207
        %v1296 = vsel %vm509, %v1209, 0.0
        %v1297 = vadd.f32 %v1295, %v1296
        %1298 = vadd.xlane.f32.xlu0 %v1297
        %v1299 = vpop.xlane.xlu0 %1298
        %v1300 = vadd.f32 %v1211, %v1213
        %v1301 = vsel %vm509, %v1215, 0.0
        %v1302 = vadd.f32 %v1300, %v1301
        %1303 = vadd.xlane.f32.xlu0 %v1302
        %v1304 = vpop.xlane.xlu0 %1303
        %v1305 = vadd.f32 %v1217, %v1219
        %v1306 = vsel %vm509, %v1221, 0.0
        %v1307 = vadd.f32 %v1305, %v1306
        %1308 = vadd.xlane.f32.xlu0 %v1307
        %v1309 = vpop.xlane.xlu0 %1308
        %v1310 = vadd.f32 %v1223, %v1225
        %v1311 = vsel %vm509, %v1227, 0.0
        %v1312 = vadd.f32 %v1310, %v1311
        %1313 = vadd.xlane.f32.xlu0 %v1312
        %v1314 = vpop.xlane.xlu0 %1313
        %v1315 = vadd.f32 %v1229, %v1231
        %v1316 = vsel %vm509, %v1233, 0.0
        %v1317 = vadd.f32 %v1315, %v1316
        %1318 = vadd.xlane.f32.xlu0 %v1317
        %v1319 = vpop.xlane.xlu0 %1318
        %v1320 = vadd.f32 %v1235, %v1237
        %v1321 = vsel %vm509, %v1239, 0.0
        %v1322 = vadd.f32 %v1320, %v1321
        %1323 = vadd.xlane.f32.xlu0 %v1322
        %v1324 = vpop.xlane.xlu0 %1323
        %v1325 = vadd.f32 %v1241, %v1243
        %v1326 = vsel %vm509, %v1245, 0.0
        %v1327 = vadd.f32 %v1325, %v1326
        %1328 = vadd.xlane.f32.xlu0 %v1327
        %v1329 = vpop.xlane.xlu0 %1328
        %v1330 = vadd.f32 %v1247, %v1249
        %v1331 = vsel %vm509, %v1251, 0.0
        %v1332 = vadd.f32 %v1330, %v1331
        %1333 = vadd.xlane.f32.xlu0 %v1332
        %v1334 = vpop.xlane.xlu0 %1333
        %v1335 = vadd.f32 %v1253, %v1255
        %v1336 = vsel %vm509, %v1257, 0.0
        %v1337 = vadd.f32 %v1335, %v1336
        %1338 = vadd.xlane.f32.xlu0 %v1337
        %v1339 = vpop.xlane.xlu0 %1338
        %v1340 = vadd.f32 %v1259, %v1261
        %v1341 = vsel %vm509, %v1263, 0.0
        %v1342 = vadd.f32 %v1340, %v1341
        %1343 = vadd.xlane.f32.xlu0 %v1342
        %v1344 = vpop.xlane.xlu0 %1343
        %v1345 = vadd.f32 %v1265, %v1267
        %v1346 = vsel %vm509, %v1269, 0.0
        %v1347 = vadd.f32 %v1345, %v1346
        %1348 = vadd.xlane.f32.xlu0 %v1347
        %v1349 = vpop.xlane.xlu0 %1348
        %v1350 = vlog2.pop %v1274
        %v1351 = vmul.f32 %v1350, 0.6931472
        %v1352 = vlog2.pop %v1279
        %v1353 = vmul.f32 %v1352, 0.6931472
        %v1354 = vlog2.pop %v1284
        %v1355 = vmul.f32 %v1354, 0.6931472
        %v1356 = vlog2.pop %v1289
        %v1357 = vmul.f32 %v1356, 0.6931472
        %v1358 = vlog2.pop %v1294
        %v1359 = vmul.f32 %v1358, 0.6931472
        %v1360 = vlog2.pop %v1299
        %v1361 = vmul.f32 %v1360, 0.6931472
        %v1362 = vlog2.pop %v1304
        %v1363 = vmul.f32 %v1362, 0.6931472
        %v1364 = vlog2.pop %v1309
        %v1365 = vmul.f32 %v1364, 0.6931472
        %v1366 = vlog2.pop %v1314
        %v1367 = vmul.f32 %v1366, 0.6931472
        %v1368 = vlog2.pop %v1319
        %v1369 = vmul.f32 %v1368, 0.6931472
        %v1370 = vlog2.pop %v1324
        %v1371 = vmul.f32 %v1370, 0.6931472
        %v1372 = vlog2.pop %v1329
        %v1373 = vmul.f32 %v1372, 0.6931472
        %v1374 = vlog2.pop %v1334
        %v1375 = vmul.f32 %v1374, 0.6931472
        %v1376 = vlog2.pop %v1339
        %v1377 = vmul.f32 %v1376, 0.6931472
        %v1378 = vlog2.pop %v1344
        %v1379 = vmul.f32 %v1378, 0.6931472
        %v1380 = vlog2.pop %v1349
        %v1381 = vmul.f32 %v1380, 0.6931472
        %v1382 = vadd.f32 %v1351, %v1050
        %v1383 = vadd.f32 %v1353, %v1055
        %v1384 = vadd.f32 %v1355, %v1060
        %v1385 = vadd.f32 %v1357, %v1065
        %v1386 = vadd.f32 %v1359, %v1070
        %v1387 = vadd.f32 %v1361, %v1075
        %v1388 = vadd.f32 %v1363, %v1080
        %v1389 = vadd.f32 %v1365, %v1085
        %v1390 = vadd.f32 %v1367, %v1090
        %v1391 = vadd.f32 %v1369, %v1095
        %v1392 = vadd.f32 %v1371, %v1100
        %v1393 = vadd.f32 %v1373, %v1105
        %v1394 = vadd.f32 %v1375, %v1110
        %v1395 = vadd.f32 %v1377, %v1115
        %v1396 = vadd.f32 %v1379, %v1120
        %v1397 = vadd.f32 %v1381, %v1125
        %v1398 = vld [vmem:[%s329] sm:$0xff]
        %v1399 = vld [vmem:[%s329 + $0x8] sm:$0xff]
        %v1400 = vld [vmem:[%s329 + $0x10] sm:$0xff]
        %v1401 = vld [vmem:[%s329 + $0x18] sm:$0xff]
        %v1402 = vld [vmem:[%s329 + $0x20] sm:$0xff]
        %v1403 = vld [vmem:[%s329 + $0x28] sm:$0xff]
        %v1404 = vld [vmem:[%s329 + $0x30] sm:$0xff]
        %v1405 = vld [vmem:[%s329 + $0x38] sm:$0xff]
        %v1406 = vld [vmem:[%s329 + $0x40] sm:$0xff]
        %v1407 = vld [vmem:[%s329 + $0x48] sm:$0xff]
        %v1408 = vld [vmem:[%s329 + $0x50] sm:$0xff]
        %v1409 = vld [vmem:[%s329 + $0x58] sm:$0xff]
        %v1410 = vld [vmem:[%s329 + $0x60] sm:$0xff]
        %v1411 = vld [vmem:[%s329 + $0x68] sm:$0xff]
        %v1412 = vld [vmem:[%s329 + $0x70] sm:$0xff]
        %v1413 = vld [vmem:[%s329 + $0x78] sm:$0xff]
        %v1414 = vsel %vm444, %v1398, 0.0
        %v1415 = vsel %vm445, %v1399, 0.0
        %v1416 = vsel %vm446, %v1400, 0.0
        %v1417 = vsel %vm447, %v1401, 0.0
        %v1418 = vsel %vm448, %v1402, 0.0
        %v1419 = vsel %vm449, %v1403, 0.0
        %v1420 = vsel %vm450, %v1404, 0.0
        %v1421 = vsel %vm451, %v1405, 0.0
        %v1422 = vsel %vm452, %v1406, 0.0
        %v1423 = vsel %vm453, %v1407, 0.0
        %v1424 = vsel %vm454, %v1408, 0.0
        %v1425 = vsel %vm455, %v1409, 0.0
        %v1426 = vsel %vm456, %v1410, 0.0
        %v1427 = vsel %vm457, %v1411, 0.0
        %v1428 = vsel %vm458, %v1412, 0.0
        %v1429 = vsel %vm459, %v1413, 0.0
        %1430 = vadd.xlane.f32.xlu0 %v1414
        %v1431 = vpop.xlane.xlu0 %1430
        %1432 = vadd.xlane.f32.xlu0 %v1415
        %v1433 = vpop.xlane.xlu0 %1432
        %1434 = vadd.xlane.f32.xlu0 %v1416
        %v1435 = vpop.xlane.xlu0 %1434
        %1436 = vadd.xlane.f32.xlu0 %v1417
        %v1437 = vpop.xlane.xlu0 %1436
        %1438 = vadd.xlane.f32.xlu0 %v1418
        %v1439 = vpop.xlane.xlu0 %1438
        %1440 = vadd.xlane.f32.xlu0 %v1419
        %v1441 = vpop.xlane.xlu0 %1440
        %1442 = vadd.xlane.f32.xlu0 %v1420
        %v1443 = vpop.xlane.xlu0 %1442
        %1444 = vadd.xlane.f32.xlu0 %v1421
        %v1445 = vpop.xlane.xlu0 %1444
        %1446 = vadd.xlane.f32.xlu0 %v1422
        %v1447 = vpop.xlane.xlu0 %1446
        %1448 = vadd.xlane.f32.xlu0 %v1423
        %v1449 = vpop.xlane.xlu0 %1448
        %1450 = vadd.xlane.f32.xlu0 %v1424
        %v1451 = vpop.xlane.xlu0 %1450
        %1452 = vadd.xlane.f32.xlu0 %v1425
        %v1453 = vpop.xlane.xlu0 %1452
        %1454 = vadd.xlane.f32.xlu0 %v1426
        %v1455 = vpop.xlane.xlu0 %1454
        %1456 = vadd.xlane.f32.xlu0 %v1427
        %v1457 = vpop.xlane.xlu0 %1456
        %1458 = vadd.xlane.f32.xlu0 %v1428
        %v1459 = vpop.xlane.xlu0 %1458
        %1460 = vadd.xlane.f32.xlu0 %v1429
        %v1461 = vpop.xlane.xlu0 %1460
        %v1462 = vsub.f32 %v1382, %v1431
        %v1463 = vsub.f32 %v1383, %v1433
        %v1464 = vsub.f32 %v1384, %v1435
        %v1465 = vsub.f32 %v1385, %v1437
        %v1466 = vsub.f32 %v1386, %v1439
        %v1467 = vsub.f32 %v1387, %v1441
        %v1468 = vsub.f32 %v1388, %v1443
        %v1469 = vsub.f32 %v1389, %v1445
        %v1470 = vsub.f32 %v1390, %v1447
        %v1471 = vsub.f32 %v1391, %v1449
        %v1472 = vsub.f32 %v1392, %v1451
        %v1473 = vsub.f32 %v1393, %v1453
        %v1474 = vsub.f32 %v1394, %v1455
        %v1475 = vsub.f32 %v1395, %v1457
        %v1476 = vsub.f32 %v1396, %v1459
        %v1477 = vsub.f32 %v1397, %v1461
        %v1478 = vsel %vm426, %v1462, 0.0
        %v1479 = vsel %vm427, %v1463, 0.0
        %v1480 = vsel %vm428, %v1464, 0.0
        %v1481 = vsel %vm429, %v1465, 0.0
        %v1482 = vsel %vm430, %v1466, 0.0
        %v1483 = vsel %vm431, %v1467, 0.0
        %v1484 = vsel %vm432, %v1468, 0.0
        %v1485 = vsel %vm433, %v1469, 0.0
        %v1486 = vsel %vm434, %v1470, 0.0
        %v1487 = vsel %vm435, %v1471, 0.0
        %v1488 = vsel %vm436, %v1472, 0.0
        %v1489 = vsel %vm437, %v1473, 0.0
        %v1490 = vsel %vm438, %v1474, 0.0
        %v1491 = vsel %vm439, %v1475, 0.0
        %v1492 = vsel %vm440, %v1476, 0.0
        %v1493 = vsel %vm441, %v1477, 0.0
        %v1494 = vsel %vm957, %v1478, 0.0
        %v1495 = vsel %vm957, %v1479, 0.0
        %v1496 = vadd.f32 %v1494, %v1495
        %v1497 = vsel %vm957, %v1480, 0.0
        %v1498 = vadd.f32 %v1496, %v1497
        %v1499 = vsel %vm957, %v1481, 0.0
        %v1500 = vadd.f32 %v1498, %v1499
        %v1501 = vsel %vm957, %v1482, 0.0
        %v1502 = vadd.f32 %v1500, %v1501
        %v1503 = vsel %vm957, %v1483, 0.0
        %v1504 = vadd.f32 %v1502, %v1503
        %v1505 = vsel %vm957, %v1484, 0.0
        %v1506 = vadd.f32 %v1504, %v1505
        %v1507 = vsel %vm957, %v1485, 0.0
        %v1508 = vadd.f32 %v1506, %v1507
        %v1509 = vsel %vm957, %v1486, 0.0
        %v1510 = vadd.f32 %v1508, %v1509
        %v1511 = vsel %vm957, %v1487, 0.0
        %v1512 = vadd.f32 %v1510, %v1511
        %v1513 = vsel %vm957, %v1488, 0.0
        %v1514 = vadd.f32 %v1512, %v1513
        %v1515 = vsel %vm957, %v1489, 0.0
        %v1516 = vadd.f32 %v1514, %v1515
        %v1517 = vsel %vm957, %v1490, 0.0
        %v1518 = vadd.f32 %v1516, %v1517
        %v1519 = vsel %vm957, %v1491, 0.0
        %v1520 = vadd.f32 %v1518, %v1519
        %v1521 = vsel %vm957, %v1492, 0.0
        %v1522 = vadd.f32 %v1520, %v1521
        %v1523 = vsel %vm957, %v1493, 0.0
        %v1524 = vadd.f32 %v1522, %v1523
        %1525 = vadd.xlane.f32.xlu0 %v1524
        %v1526 = vpop.xlane.xlu0 %1525
        %v1527 = vrot.slane %v1526, 4
        %v1528 = vadd.f32 %v1526, %v1527
        %v1529 = vrot.slane %v1528, 2
        %v1530 = vadd.f32 %v1528, %v1529
        %v1531 = vrot.slane %v1530, 1
        %v1532 = vadd.f32 %v1530, %v1531
        %s1533 = vtos %v1532
        %v1534 = vmul.u32 %v393, 128
        %v1535 = vadd.s32 %v1534, %v443
        %vm1536 = vcmp.eq.s32.totalorder %v1535, 0
        %vm1537 = vcmp.eq.s32.totalorder %v1535, 1
        %v1538 = vstv %s1533
        %v1539 = vsel %vm1537, %v1538, 0.0
        %v1540 = vstv %s997
        %v1541 = vsel %vm1536, %v1540, %v1539
        %1542 = vst [vmem:[%s368] sm:$0xff] %v1541
        %s1543 = sand.u32 %s143, 1
        %s1544 = scalar_lea.sflag [#allocation4], %s1543
        %s1545 = sand.u32 %s143, 1
        %s1546 = smul.addr %s1545, 8
        %s1547 = scalar_lea.vmem [#allocation10], %s1546
        // Predicated region
        $region53: #{tpu_custom_call.1} parent=35 // pred_check
          %p1548 = pneg %p153
        $region54: #{tpu_custom_call.1} parent=35 // pred_check_branch
          %1550 = sbr.rel (%p1548) target = $region56
        $region55: #{tpu_custom_call.1} parent=35 // pred_region
          %s1552 = ssub.s32 128, 128
          %1553 = vsyncadd %s1544, %s1552
          %s1554 = smul.addr %s27, 128
          %s1555 = scalar_lea.hbm %s4, %s1554
          %s1557 = sshll.u32 %s1547, 4
          %s1558 = int_to_ptr.vmem [resolvable:$true] %s1557
          %1560 = dma.vmem_to_hbm [thread:$0]  %s1558, 128, %s1555, %s1544
        $region56: #{tpu_custom_call.1} parent=35 // pred_fallthru
          _
      $region36: #{tpu_custom_call.1} parent=5 // pred_fallthru
        _
      %p1561 = scmp.le.s32.totalorder 2, %s22
      // Predicated region
      $region57: #{tpu_custom_call.1} parent=5 // pred_check
        %p1562 = pneg %p1561
      $region58: #{tpu_custom_call.1} parent=5 // pred_check_branch
        %1564 = sbr.rel (%p1562) target = $region60
      $region59: #{tpu_custom_call.1} parent=5 // pred_region
        %s1565 = ssub.s32 %s22, 2
        // Predicated region
        $region61: #{tpu_custom_call.1} parent=59 // pred_check
          %p1566 = pneg %p159
        $region62: #{tpu_custom_call.1} parent=59 // pred_check_branch
          %1568 = sbr.rel (%p1566) target = $region64
        $region63: #{tpu_custom_call.1} parent=59 // pred_region
          %s1569 = sand.u32 %s144, 1
          %s1570 = scalar_lea.sflag [#allocation4], %s1569
          %s1571 = sand.u32 %s144, 1
          %s1572 = smul.addr %s1571, 8
          %s1573 = scalar_lea.vmem [#allocation10], %s1572
          %1574 = dma.done %s1570, 128
        $region64: #{tpu_custom_call.1} parent=59 // pred_fallthru
          _
      $region60: #{tpu_custom_call.1} parent=5 // pred_fallthru
        _
    $region6: #{tpu_custom_call.1} parent=1 // loop_footer
      %s26 = sadd.s32 1, %s22
    $region7: #{tpu_custom_call.1} parent=1 // loop_footer_branch
      %21 = sbr.rel target = $region3
    $region8: #{tpu_custom_call.1} parent=1 // loop_exit
      _
    %1575 = vsyncpa [#allocation3], 1
    %s1576 = scalar_lea.sflag [#allocation3], 1
    %1577 = vsyncpa %s1576, 1
    %1578 = vsyncpa [#allocation6], 1
    %s1579 = scalar_lea.sflag [#allocation6], 1
    %1580 = vsyncpa %s1579, 1
    %1581 = vsyncpa [#allocation9], 1
    %s1582 = scalar_lea.sflag [#allocation9], 1
    %1583 = vsyncpa %s1582, 1
    %1584 = vsyncpa [#allocation4], 1
    %s1585 = scalar_lea.sflag [#allocation4], 1
    %1586 = vsyncpa %s1585, 1

</llo_original>
